<compile_context>
chip_gen: v5e
topology: v5e:2x2
jax: 0.10.0
libtpu: 0.0.40
codegen_flags: <defaults>
</compile_context>

<pallas_src>
import jax
import jax.numpy as jnp
import numpy as np
from jax.experimental import pallas as pl
from jax.experimental.pallas import tpu as pltpu

# Fixed additive attention masks from the module (used by the pure-JAX reference).
MASK0 = ((0.0, 0.0, 0.0, -100.0),
         (0.0, 0.0, -100.0, 0.0),
         (0.0, -100.0, 0.0, 0.0),
         (-100.0, 0.0, 0.0, 0.0))
MASK1 = ((0.0, -100.0, 0.0, -100.0),
         (-100.0, 0.0, -100.0, 0.0),
         (-100.0, -100.0, -100.0, -100.0),
         (-100.0, -100.0, -100.0, -100.0))


def _attend(q, keys, values, s_blk):
    """Masked cross-modality attention for one query slot.

    q       : (Tq, inner) f32 queries (scale already folded into Wq).
    keys    : list of (Tk_j, inner) f32, Tk_j in {1, T} (constant rows stay 1-row).
    values  : list of (Tv_j, inner) f32.
    s_blk   : (inner, inner) bf16 block-diagonal head selector (S = sel @ sel.T).

    dots_j = (q*k_j) @ S holds the per-head q.k broadcast across the head's
    lanes, so the softmax and the value weighting stay lane-dense. Shapes
    broadcast lazily, so constant (guidance) rows cost 1-row matmuls only.
    """
    dots = [jnp.dot((q * k).astype(s_blk.dtype), s_blk,
                    preferred_element_type=jnp.float32) for k in keys]
    m = dots[0]
    for dd in dots[1:]:
        m = jnp.maximum(m, dd)
    es = [jnp.exp(dd - m) for dd in dots]
    den = es[0]
    for e in es[1:]:
        den = den + e
    acc = es[0] * values[0]
    for e, v in zip(es[1:], values[1:]):
        acc = acc + e * v
    return acc * pl.reciprocal(den, approx=True)


def relation_double_kernel(x_ref, y_ref, guide_ref,
                           wqkv0_ref, wout0_ref, bout0_ref,
                           wqkv1_ref, wout1_ref, bout1_ref,
                           s_ref,
                           ox_ref, oy_ref):
    inner = s_ref.shape[0]
    s_blk = s_ref[...]                      # (inner, inner) bf16, block-diag 0/1
    wqkv0 = wqkv0_ref[...]                  # (d, 3*inner) bf16, scale folded into Wq
    wqkv1 = wqkv1_ref[...]
    wout0 = wout0_ref[...]                  # (inner, d) bf16
    wout1 = wout1_ref[...]
    b0 = bout0_ref[...]                     # (1, d) f32
    b1 = bout1_ref[...]

    def qkv(rows, w):
        o = jnp.dot(rows.astype(w.dtype), w, preferred_element_type=jnp.float32)
        return o[:, :inner], o[:, inner:2 * inner], o[:, 2 * inner:]

    def proj(acc, wout, b):
        return jnp.dot(acc.astype(wout.dtype), wout,
                       preferred_element_type=jnp.float32) + b

    # ---------------- stage 1 ----------------
    qx, kx, vx = qkv(x_ref[...], wqkv0)          # (T, inner)
    qy, ky, vy = qkv(y_ref[...], wqkv0)          # (T, inner)
    qg, kg, vg = qkv(guide_ref[...], wqkv0)      # (2, inner): row0=rgb, row1=depth
    q2, k2, v2 = qg[0:1], kg[0:1], vg[0:1]
    q3, k3, v3 = qg[1:2], kg[1:2], vg[1:2]

    # mask0 key sets: slot0 {0,1,2}, slot1 {0,1,3}, slot2 {0,2,3}, slot3 {1,2,3}
    z0 = proj(_attend(qx, [kx, ky, k2], [vx, vy, v2], s_blk), wout0, b0)
    z1 = proj(_attend(qy, [kx, ky, k3], [vx, vy, v3], s_blk), wout0, b0)
    z2 = proj(_attend(q2, [kx, k2, k3], [vx, v2, v3], s_blk), wout0, b0)
    z3 = proj(_attend(q3, [ky, k2, k3], [vy, v2, v3], s_blk), wout0, b0)

    # ---------------- stage 2 ----------------
    q0b, k0b, v0b = qkv(z0, wqkv1)
    q1b, k1b, v1b = qkv(z1, wqkv1)
    _,   k2b, v2b = qkv(z2, wqkv1)
    _,   k3b, v3b = qkv(z3, wqkv1)

    # mask1 key sets: slot0 {0,2}, slot1 {1,3}; only x1 / y1 are returned.
    x1 = proj(_attend(q0b, [k0b, k2b], [v0b, v2b], s_blk), wout1, b1)
    y1 = proj(_attend(q1b, [k1b, k3b], [v1b, v3b], s_blk), wout1, b1)

    ox_ref[...] = x1.astype(ox_ref.dtype)
    oy_ref[...] = y1.astype(oy_ref.dtype)


def _pick_token_tile(p, d, inner, max_tile=256, budget_bytes=20 << 20):
    """Largest token tile that divides p, is 8/16-aligned and fits the VMEM budget."""
    per_tok = 104 * inner + 40 * d + 64     # rough live f32 intermediates + I/O bytes/token
    limit = int(min(max_tile, max(8, budget_bytes // per_tok)))
    if p <= limit:
        return p
    cands = [t for t in range(8, limit + 1, 8) if p % t == 0]
    if not cands:
        # TODO(synk): no 8-aligned divisor of p under the budget; fall back to the
        # full axis (legal, but VMEM-heavy for very large ragged p).
        return p
    c16 = [t for t in cands if t % 16 == 0]
    return (c16 or cands)[-1]


def relation_model_double(x, y, params, heads, dim_head, *, max_token_tile=256):
    b, p, d = x.shape
    inner = heads * dim_head
    scale = dim_head ** (-0.5)
    T = _pick_token_tile(p, d, inner, max_tile=max_token_tile)
    assert p % T == 0

    cdt = jnp.bfloat16
    xb = x.astype(cdt)
    yb = y.astype(cdt)
    # Guidance tokens: avg_pool1d over p == mean over tokens; one (b, 2, d) block
    # (row 0 = rgb guidance, row 1 = depth guidance), never broadcast to p rows.
    guide = jnp.concatenate([jnp.mean(x, axis=1, keepdims=True),
                             jnp.mean(y, axis=1, keepdims=True)], axis=1).astype(cdt)

    # Fused [Wq*scale | Wk | Wv] projection weights, bf16 for the MXU.
    wqkv0 = jnp.concatenate([params['wq0'] * scale, params['wk0'], params['wv0']],
                            axis=1).astype(cdt)            # (d, 3*inner)
    wqkv1 = jnp.concatenate([params['wq1'] * scale, params['wk1'], params['wv1']],
                            axis=1).astype(cdt)
    wout0 = params['wout0'].astype(cdt)                    # (inner, d)
    wout1 = params['wout1'].astype(cdt)
    bout0 = params['bout0'].reshape(1, d).astype(jnp.float32)
    bout1 = params['bout1'].reshape(1, d).astype(jnp.float32)

    # S = sel @ sel.T : (inner, inner) block-diagonal ones, exact in bf16.
    lane_head = jnp.arange(inner) // dim_head
    s_blk = (lane_head[:, None] == lane_head[None, :]).astype(cdt)

    grid = (b, p // T)
    tok_spec = lambda: pl.BlockSpec((None, T, d), lambda bi, ti: (bi, ti, 0))
    full2 = lambda shape: pl.BlockSpec(shape, lambda bi, ti: (0, 0))

    out_x, out_y = pl.pallas_call(
        relation_double_kernel,
        grid=grid,
        in_specs=[
            tok_spec(), tok_spec(),
            pl.BlockSpec((None, 2, d), lambda bi, ti: (bi, 0, 0)),
            full2((d, 3 * inner)), full2((inner, d)), full2((1, d)),
            full2((d, 3 * inner)), full2((inner, d)), full2((1, d)),
            full2((inner, inner)),
        ],
        out_specs=[tok_spec(), tok_spec()],
        out_shape=[jax.ShapeDtypeStruct((b, p, d), x.dtype),
                   jax.ShapeDtypeStruct((b, p, d), x.dtype)],
        compiler_params=pltpu.CompilerParams(
            dimension_semantics=("parallel", "parallel"),
            vmem_limit_bytes=48 * 1024 * 1024),
    )(xb, yb, guide,
      wqkv0, wout0, bout0,
      wqkv1, wout1, bout1,
      s_blk)

    return out_x, out_y


def reference_forward(x, y, params, heads, dim_head):
    """Pure-JAX f32 reference mirroring the PyTorch forward (eval mode)."""
    b, p, d = x.shape
    inner = heads * dim_head
    scale = dim_head ** (-0.5)
    rgb_g = jnp.broadcast_to(jnp.mean(x, axis=1, keepdims=True), (b, p, d))
    dep_g = jnp.broadcast_to(jnp.mean(y, axis=1, keepdims=True), (b, p, d))
    z = jnp.stack([x, y, rgb_g, dep_g], axis=2)            # (b, p, 4, d)
    mask0 = jnp.array(MASK0, jnp.float32)
    mask1 = jnp.array(MASK1, jnp.float32)

    def stage(zin, wq, wk, wv, wout, bout, mask):
        def split(t):  # (b,p,4,inner) -> (b,p,h,4,dh)
            return t.reshape(b, p, 4, heads, dim_head).transpose(0, 1, 3, 2, 4)
        q, k, v = split(zin @ wq), split(zin @ wk), split(zin @ wv)
        dots = jnp.einsum('bphid,bphjd->bphij', q, k) * scale + mask
        a = jax.nn.softmax(dots, axis=-1)
        o = jnp.einsum('bphij,bphjd->bphid', a, v)
        o = o.transpose(0, 1, 3, 2, 4).reshape(b, p, 4, inner)
        return o @ wout + bout

    z1 = stage(z, params['wq0'], params['wk0'], params['wv0'],
               params['wout0'], params['bout0'], mask0)
    z2 = stage(z1, params['wq1'], params['wk1'], params['wv1'],
               params['wout1'], params['bout1'], mask1)
    return z2[:, :, 0, :], z2[:, :, 1, :]


if __name__ == "__main__":
    # Small shapes consistent with the module: x, y : (b, p, dim)
    b, p, dim = 2, 8, 32
    heads, dim_head = 2, 16
    inner = heads * dim_head

    key = jax.random.PRNGKey(0)
    ks = jax.random.split(key, 12)
    s_in = 1.0 / (dim ** 0.5)
    s_out = 1.0 / (inner ** 0.5)
    params = {
        'wq0':   jax.random.normal(ks[0], (dim, inner), jnp.float32) * s_in,
        'wk0':   jax.random.normal(ks[1], (dim, inner), jnp.float32) * s_in,
        'wv0':   jax.random.normal(ks[2], (dim, inner), jnp.float32) * s_in,
        'wout0': jax.random.normal(ks[3], (inner, dim), jnp.float32) * s_out,
        'bout0': jax.random.normal(ks[4], (dim,), jnp.float32) * 0.01,
        'wq1':   jax.random.normal(ks[5], (dim, inner), jnp.float32) * s_in,
        'wk1':   jax.random.normal(ks[6], (dim, inner), jnp.float32) * s_in,
        'wv1':   jax.random.normal(ks[7], (dim, inner), jnp.float32) * s_in,
        'wout1': jax.random.normal(ks[8], (inner, dim), jnp.float32) * s_out,
        'bout1': jax.random.normal(ks[9], (dim,), jnp.float32) * 0.01,
    }
    x = jax.random.normal(ks[10], (b, p, dim), jnp.float32)
    y = jax.random.normal(ks[11], (b, p, dim), jnp.float32)

    x1, y1 = relation_model_double(x, y, params, heads, dim_head)
    jax.block_until_ready((x1, y1))

    rx, ry = reference_forward(x, y, params, heads, dim_head)
    # Kernel feeds the MXU bf16 operands (f32 accumulate) and uses the EUP
    # approximate reciprocal in the softmax; tolerance vs. the pure-f32
    # reference reflects bf16 operand precision, not a semantic difference.
    np.testing.assert_allclose(np.asarray(x1), np.asarray(rx), atol=5e-2, rtol=5e-2)
    np.testing.assert_allclose(np.asarray(y1), np.asarray(ry), atol=5e-2, rtol=5e-2)

    print("KERNEL_OK")
</pallas_src>

<mosaic_0001>
module attributes {stable_mosaic.version = 11 : i64} {
  func.func @relation_double_kernel(%arg0: i32, %arg1: i32, %arg2: memref<1x8x32xbf16, #tpu.memory_space<vmem>>, %arg3: memref<1x8x32xbf16, #tpu.memory_space<vmem>>, %arg4: memref<1x2x32xbf16, #tpu.memory_space<vmem>>, %arg5: memref<32x96xbf16, #tpu.memory_space<vmem>>, %arg6: memref<32x32xbf16, #tpu.memory_space<vmem>>, %arg7: memref<1x32xf32, #tpu.memory_space<vmem>>, %arg8: memref<32x96xbf16, #tpu.memory_space<vmem>>, %arg9: memref<32x32xbf16, #tpu.memory_space<vmem>>, %arg10: memref<1x32xf32, #tpu.memory_space<vmem>>, %arg11: memref<32x32xbf16, #tpu.memory_space<vmem>>, %arg12: memref<1x8x32xf32, #tpu.memory_space<vmem>>, %arg13: memref<1x8x32xf32, #tpu.memory_space<vmem>>) attributes {dimension_semantics = [#tpu.dimension_semantics<parallel>, #tpu.dimension_semantics<parallel>], iteration_bounds = array<i64: 2, 1>, scalar_prefetch = 0 : i64, scratch_operands = 0 : i64, tpu.core_type = #tpu.core_type<tc>, window_params = [{transform_indices = @transform_0, window_bounds = array<i64: 1, 8, 32>}, {transform_indices = @transform_1, window_bounds = array<i64: 1, 8, 32>}, {transform_indices = @transform_2, window_bounds = array<i64: 1, 2, 32>}, {pipeline_mode = #tpu.pipeline_mode<synchronous>, transform_indices = @transform_3, window_bounds = array<i64: 32, 96>}, {pipeline_mode = #tpu.pipeline_mode<synchronous>, transform_indices = @transform_4, window_bounds = array<i64: 32, 32>}, {pipeline_mode = #tpu.pipeline_mode<synchronous>, transform_indices = @transform_5, window_bounds = array<i64: 1, 32>}, {pipeline_mode = #tpu.pipeline_mode<synchronous>, transform_indices = @transform_6, window_bounds = array<i64: 32, 96>}, {pipeline_mode = #tpu.pipeline_mode<synchronous>, transform_indices = @transform_7, window_bounds = array<i64: 32, 32>}, {pipeline_mode = #tpu.pipeline_mode<synchronous>, transform_indices = @transform_8, window_bounds = array<i64: 1, 32>}, {pipeline_mode = #tpu.pipeline_mode<synchronous>, transform_indices = @transform_9, window_bounds = array<i64: 32, 32>}, {transform_indices = @transform_10, window_bounds = array<i64: 1, 8, 32>}, {transform_indices = @transform_11, window_bounds = array<i64: 1, 8, 32>}]} {
    %c0 = arith.constant 0 : index
    %c0_0 = arith.constant 0 : index
    %0 = vector.load %arg11[%c0, %c0_0] : memref<32x32xbf16, #tpu.memory_space<vmem>>, vector<32x32xbf16>
    %c0_1 = arith.constant 0 : index
    %c0_2 = arith.constant 0 : index
    %1 = vector.load %arg5[%c0_1, %c0_2] : memref<32x96xbf16, #tpu.memory_space<vmem>>, vector<32x96xbf16>
    %c0_3 = arith.constant 0 : index
    %c0_4 = arith.constant 0 : index
    %2 = vector.load %arg8[%c0_3, %c0_4] : memref<32x96xbf16, #tpu.memory_space<vmem>>, vector<32x96xbf16>
    %c0_5 = arith.constant 0 : index
    %c0_6 = arith.constant 0 : index
    %3 = vector.load %arg6[%c0_5, %c0_6] : memref<32x32xbf16, #tpu.memory_space<vmem>>, vector<32x32xbf16>
    %c0_7 = arith.constant 0 : index
    %c0_8 = arith.constant 0 : index
    %4 = vector.load %arg9[%c0_7, %c0_8] : memref<32x32xbf16, #tpu.memory_space<vmem>>, vector<32x32xbf16>
    %c0_9 = arith.constant 0 : index
    %c0_10 = arith.constant 0 : index
    %5 = vector.load %arg7[%c0_9, %c0_10] : memref<1x32xf32, #tpu.memory_space<vmem>>, vector<1x32xf32>
    %c0_11 = arith.constant 0 : index
    %c0_12 = arith.constant 0 : index
    %6 = vector.load %arg10[%c0_11, %c0_12] : memref<1x32xf32, #tpu.memory_space<vmem>>, vector<1x32xf32>
    %c0_13 = arith.constant 0 : index
    %c0_14 = arith.constant 0 : index
    %c0_15 = arith.constant 0 : index
    %7 = vector.load %arg2[%c0_13, %c0_14, %c0_15] : memref<1x8x32xbf16, #tpu.memory_space<vmem>>, vector<1x8x32xbf16>
    %8 = vector.shape_cast %7 : vector<1x8x32xbf16> to vector<8x32xbf16>
    %cst = arith.constant dense<0.000000e+00> : vector<8x96xf32>
    %9 = tpu.matmul %8, %1, %cst {dimension_numbers = #tpu.dot_dimension_numbers<[1], [0], [0], [1], [0, 0, 1, 1], [], []>} : vector<8x32xbf16>, vector<32x96xbf16>, vector<8x96xf32> -> vector<8x96xf32>
    %10 = vector.extract_strided_slice %9 {offsets = [0, 0], sizes = [8, 32], strides = [1, 1]} : vector<8x96xf32> to vector<8x32xf32>
    %11 = vector.extract_strided_slice %9 {offsets = [0, 32], sizes = [8, 32], strides = [1, 1]} : vector<8x96xf32> to vector<8x32xf32>
    %12 = vector.extract_strided_slice %9 {offsets = [0, 64], sizes = [8, 32], strides = [1, 1]} : vector<8x96xf32> to vector<8x32xf32>
    %c0_16 = arith.constant 0 : index
    %c0_17 = arith.constant 0 : index
    %c0_18 = arith.constant 0 : index
    %13 = vector.load %arg3[%c0_16, %c0_17, %c0_18] : memref<1x8x32xbf16, #tpu.memory_space<vmem>>, vector<1x8x32xbf16>
    %14 = vector.shape_cast %13 : vector<1x8x32xbf16> to vector<8x32xbf16>
    %cst_19 = arith.constant dense<0.000000e+00> : vector<8x96xf32>
    %15 = tpu.matmul %14, %1, %cst_19 {dimension_numbers = #tpu.dot_dimension_numbers<[1], [0], [0], [1], [0, 0, 1, 1], [], []>} : vector<8x32xbf16>, vector<32x96xbf16>, vector<8x96xf32> -> vector<8x96xf32>
    %16 = vector.extract_strided_slice %15 {offsets = [0, 0], sizes = [8, 32], strides = [1, 1]} : vector<8x96xf32> to vector<8x32xf32>
    %17 = vector.extract_strided_slice %15 {offsets = [0, 32], sizes = [8, 32], strides = [1, 1]} : vector<8x96xf32> to vector<8x32xf32>
    %18 = vector.extract_strided_slice %15 {offsets = [0, 64], sizes = [8, 32], strides = [1, 1]} : vector<8x96xf32> to vector<8x32xf32>
    %c0_20 = arith.constant 0 : index
    %c0_21 = arith.constant 0 : index
    %c0_22 = arith.constant 0 : index
    %19 = vector.load %arg4[%c0_20, %c0_21, %c0_22] : memref<1x2x32xbf16, #tpu.memory_space<vmem>>, vector<1x2x32xbf16>
    %20 = vector.shape_cast %19 : vector<1x2x32xbf16> to vector<2x32xbf16>
    %cst_23 = arith.constant dense<0.000000e+00> : vector<2x96xf32>
    %21 = tpu.matmul %20, %1, %cst_23 {dimension_numbers = #tpu.dot_dimension_numbers<[1], [0], [0], [1], [0, 0, 1, 1], [], []>} : vector<2x32xbf16>, vector<32x96xbf16>, vector<2x96xf32> -> vector<2x96xf32>
    %22 = vector.extract_strided_slice %21 {offsets = [0, 0], sizes = [2, 32], strides = [1, 1]} : vector<2x96xf32> to vector<2x32xf32>
    %23 = vector.extract_strided_slice %21 {offsets = [0, 32], sizes = [2, 32], strides = [1, 1]} : vector<2x96xf32> to vector<2x32xf32>
    %24 = vector.extract_strided_slice %21 {offsets = [0, 64], sizes = [2, 32], strides = [1, 1]} : vector<2x96xf32> to vector<2x32xf32>
    %25 = vector.extract_strided_slice %22 {offsets = [0, 0], sizes = [1, 32], strides = [1, 1]} : vector<2x32xf32> to vector<1x32xf32>
    %26 = vector.extract_strided_slice %23 {offsets = [0, 0], sizes = [1, 32], strides = [1, 1]} : vector<2x32xf32> to vector<1x32xf32>
    %27 = vector.extract_strided_slice %24 {offsets = [0, 0], sizes = [1, 32], strides = [1, 1]} : vector<2x32xf32> to vector<1x32xf32>
    %28 = vector.extract_strided_slice %22 {offsets = [1, 0], sizes = [1, 32], strides = [1, 1]} : vector<2x32xf32> to vector<1x32xf32>
    %29 = vector.extract_strided_slice %23 {offsets = [1, 0], sizes = [1, 32], strides = [1, 1]} : vector<2x32xf32> to vector<1x32xf32>
    %30 = vector.extract_strided_slice %24 {offsets = [1, 0], sizes = [1, 32], strides = [1, 1]} : vector<2x32xf32> to vector<1x32xf32>
    %31 = arith.mulf %10, %11 : vector<8x32xf32>
    %32 = arith.truncf %31 : vector<8x32xf32> to vector<8x32xbf16>
    %cst_24 = arith.constant dense<0.000000e+00> : vector<8x32xf32>
    %33 = tpu.matmul %32, %0, %cst_24 {dimension_numbers = #tpu.dot_dimension_numbers<[1], [0], [0], [1], [0, 0, 1, 1], [], []>} : vector<8x32xbf16>, vector<32x32xbf16>, vector<8x32xf32> -> vector<8x32xf32>
    %34 = arith.mulf %10, %17 : vector<8x32xf32>
    %35 = arith.truncf %34 : vector<8x32xf32> to vector<8x32xbf16>
    %cst_25 = arith.constant dense<0.000000e+00> : vector<8x32xf32>
    %36 = tpu.matmul %35, %0, %cst_25 {dimension_numbers = #tpu.dot_dimension_numbers<[1], [0], [0], [1], [0, 0, 1, 1], [], []>} : vector<8x32xbf16>, vector<32x32xbf16>, vector<8x32xf32> -> vector<8x32xf32>
    %37 = vector.broadcast %26 : vector<1x32xf32> to vector<8x32xf32>
    %38 = arith.mulf %10, %37 : vector<8x32xf32>
    %39 = arith.truncf %38 : vector<8x32xf32> to vector<8x32xbf16>
    %cst_26 = arith.constant dense<0.000000e+00> : vector<8x32xf32>
    %40 = tpu.matmul %39, %0, %cst_26 {dimension_numbers = #tpu.dot_dimension_numbers<[1], [0], [0], [1], [0, 0, 1, 1], [], []>} : vector<8x32xbf16>, vector<32x32xbf16>, vector<8x32xf32> -> vector<8x32xf32>
    %41 = arith.maximumf %33, %36 : vector<8x32xf32>
    %42 = arith.maximumf %41, %40 : vector<8x32xf32>
    %43 = arith.subf %33, %42 : vector<8x32xf32>
    %44 = math.exp %43 : vector<8x32xf32>
    %45 = arith.subf %36, %42 : vector<8x32xf32>
    %46 = math.exp %45 : vector<8x32xf32>
    %47 = arith.subf %40, %42 : vector<8x32xf32>
    %48 = math.exp %47 : vector<8x32xf32>
    %49 = arith.addf %44, %46 : vector<8x32xf32>
    %50 = arith.addf %49, %48 : vector<8x32xf32>
    %51 = arith.mulf %44, %12 : vector<8x32xf32>
    %52 = arith.mulf %46, %18 : vector<8x32xf32>
    %53 = arith.addf %51, %52 : vector<8x32xf32>
    %54 = vector.broadcast %27 : vector<1x32xf32> to vector<8x32xf32>
    %55 = arith.mulf %48, %54 : vector<8x32xf32>
    %56 = arith.addf %53, %55 : vector<8x32xf32>
    %57 = tpu.reciprocal %50 {approx = true} : vector<8x32xf32> -> vector<8x32xf32>
    %58 = arith.mulf %56, %57 : vector<8x32xf32>
    %59 = arith.truncf %58 : vector<8x32xf32> to vector<8x32xbf16>
    %cst_27 = arith.constant dense<0.000000e+00> : vector<8x32xf32>
    %60 = tpu.matmul %59, %3, %cst_27 {dimension_numbers = #tpu.dot_dimension_numbers<[1], [0], [0], [1], [0, 0, 1, 1], [], []>} : vector<8x32xbf16>, vector<32x32xbf16>, vector<8x32xf32> -> vector<8x32xf32>
    %61 = vector.broadcast %5 : vector<1x32xf32> to vector<8x32xf32>
    %62 = arith.addf %60, %61 : vector<8x32xf32>
    %63 = arith.mulf %16, %11 : vector<8x32xf32>
    %64 = arith.truncf %63 : vector<8x32xf32> to vector<8x32xbf16>
    %cst_28 = arith.constant dense<0.000000e+00> : vector<8x32xf32>
    %65 = tpu.matmul %64, %0, %cst_28 {dimension_numbers = #tpu.dot_dimension_numbers<[1], [0], [0], [1], [0, 0, 1, 1], [], []>} : vector<8x32xbf16>, vector<32x32xbf16>, vector<8x32xf32> -> vector<8x32xf32>
    %66 = arith.mulf %16, %17 : vector<8x32xf32>
    %67 = arith.truncf %66 : vector<8x32xf32> to vector<8x32xbf16>
    %cst_29 = arith.constant dense<0.000000e+00> : vector<8x32xf32>
    %68 = tpu.matmul %67, %0, %cst_29 {dimension_numbers = #tpu.dot_dimension_numbers<[1], [0], [0], [1], [0, 0, 1, 1], [], []>} : vector<8x32xbf16>, vector<32x32xbf16>, vector<8x32xf32> -> vector<8x32xf32>
    %69 = vector.broadcast %29 : vector<1x32xf32> to vector<8x32xf32>
    %70 = arith.mulf %16, %69 : vector<8x32xf32>
    %71 = arith.truncf %70 : vector<8x32xf32> to vector<8x32xbf16>
    %cst_30 = arith.constant dense<0.000000e+00> : vector<8x32xf32>
    %72 = tpu.matmul %71, %0, %cst_30 {dimension_numbers = #tpu.dot_dimension_numbers<[1], [0], [0], [1], [0, 0, 1, 1], [], []>} : vector<8x32xbf16>, vector<32x32xbf16>, vector<8x32xf32> -> vector<8x32xf32>
    %73 = arith.maximumf %65, %68 : vector<8x32xf32>
    %74 = arith.maximumf %73, %72 : vector<8x32xf32>
    %75 = arith.subf %65, %74 : vector<8x32xf32>
    %76 = math.exp %75 : vector<8x32xf32>
    %77 = arith.subf %68, %74 : vector<8x32xf32>
    %78 = math.exp %77 : vector<8x32xf32>
    %79 = arith.subf %72, %74 : vector<8x32xf32>
    %80 = math.exp %79 : vector<8x32xf32>
    %81 = arith.addf %76, %78 : vector<8x32xf32>
    %82 = arith.addf %81, %80 : vector<8x32xf32>
    %83 = arith.mulf %76, %12 : vector<8x32xf32>
    %84 = arith.mulf %78, %18 : vector<8x32xf32>
    %85 = arith.addf %83, %84 : vector<8x32xf32>
    %86 = vector.broadcast %30 : vector<1x32xf32> to vector<8x32xf32>
    %87 = arith.mulf %80, %86 : vector<8x32xf32>
    %88 = arith.addf %85, %87 : vector<8x32xf32>
    %89 = tpu.reciprocal %82 {approx = true} : vector<8x32xf32> -> vector<8x32xf32>
    %90 = arith.mulf %88, %89 : vector<8x32xf32>
    %91 = arith.truncf %90 : vector<8x32xf32> to vector<8x32xbf16>
    %cst_31 = arith.constant dense<0.000000e+00> : vector<8x32xf32>
    %92 = tpu.matmul %91, %3, %cst_31 {dimension_numbers = #tpu.dot_dimension_numbers<[1], [0], [0], [1], [0, 0, 1, 1], [], []>} : vector<8x32xbf16>, vector<32x32xbf16>, vector<8x32xf32> -> vector<8x32xf32>
    %93 = vector.broadcast %5 : vector<1x32xf32> to vector<8x32xf32>
    %94 = arith.addf %92, %93 : vector<8x32xf32>
    %95 = vector.broadcast %25 : vector<1x32xf32> to vector<8x32xf32>
    %96 = arith.mulf %95, %11 : vector<8x32xf32>
    %97 = arith.truncf %96 : vector<8x32xf32> to vector<8x32xbf16>
    %cst_32 = arith.constant dense<0.000000e+00> : vector<8x32xf32>
    %98 = tpu.matmul %97, %0, %cst_32 {dimension_numbers = #tpu.dot_dimension_numbers<[1], [0], [0], [1], [0, 0, 1, 1], [], []>} : vector<8x32xbf16>, vector<32x32xbf16>, vector<8x32xf32> -> vector<8x32xf32>
    %99 = arith.mulf %25, %26 : vector<1x32xf32>
    %100 = arith.truncf %99 : vector<1x32xf32> to vector<1x32xbf16>
    %cst_33 = arith.constant dense<0.000000e+00> : vector<1x32xf32>
    %101 = tpu.matmul %100, %0, %cst_33 {dimension_numbers = #tpu.dot_dimension_numbers<[1], [0], [0], [1], [0, 0, 1, 1], [], []>} : vector<1x32xbf16>, vector<32x32xbf16>, vector<1x32xf32> -> vector<1x32xf32>
    %102 = arith.mulf %25, %29 : vector<1x32xf32>
    %103 = arith.truncf %102 : vector<1x32xf32> to vector<1x32xbf16>
    %cst_34 = arith.constant dense<0.000000e+00> : vector<1x32xf32>
    %104 = tpu.matmul %103, %0, %cst_34 {dimension_numbers = #tpu.dot_dimension_numbers<[1], [0], [0], [1], [0, 0, 1, 1], [], []>} : vector<1x32xbf16>, vector<32x32xbf16>, vector<1x32xf32> -> vector<1x32xf32>
    %105 = vector.broadcast %101 : vector<1x32xf32> to vector<8x32xf32>
    %106 = arith.maximumf %98, %105 : vector<8x32xf32>
    %107 = vector.broadcast %104 : vector<1x32xf32> to vector<8x32xf32>
    %108 = arith.maximumf %106, %107 : vector<8x32xf32>
    %109 = arith.subf %98, %108 : vector<8x32xf32>
    %110 = math.exp %109 : vector<8x32xf32>
    %111 = vector.broadcast %101 : vector<1x32xf32> to vector<8x32xf32>
    %112 = arith.subf %111, %108 : vector<8x32xf32>
    %113 = math.exp %112 : vector<8x32xf32>
    %114 = vector.broadcast %104 : vector<1x32xf32> to vector<8x32xf32>
    %115 = arith.subf %114, %108 : vector<8x32xf32>
    %116 = math.exp %115 : vector<8x32xf32>
    %117 = arith.addf %110, %113 : vector<8x32xf32>
    %118 = arith.addf %117, %116 : vector<8x32xf32>
    %119 = arith.mulf %110, %12 : vector<8x32xf32>
    %120 = vector.broadcast %27 : vector<1x32xf32> to vector<8x32xf32>
    %121 = arith.mulf %113, %120 : vector<8x32xf32>
    %122 = arith.addf %119, %121 : vector<8x32xf32>
    %123 = vector.broadcast %30 : vector<1x32xf32> to vector<8x32xf32>
    %124 = arith.mulf %116, %123 : vector<8x32xf32>
    %125 = arith.addf %122, %124 : vector<8x32xf32>
    %126 = tpu.reciprocal %118 {approx = true} : vector<8x32xf32> -> vector<8x32xf32>
    %127 = arith.mulf %125, %126 : vector<8x32xf32>
    %128 = arith.truncf %127 : vector<8x32xf32> to vector<8x32xbf16>
    %cst_35 = arith.constant dense<0.000000e+00> : vector<8x32xf32>
    %129 = tpu.matmul %128, %3, %cst_35 {dimension_numbers = #tpu.dot_dimension_numbers<[1], [0], [0], [1], [0, 0, 1, 1], [], []>} : vector<8x32xbf16>, vector<32x32xbf16>, vector<8x32xf32> -> vector<8x32xf32>
    %130 = vector.broadcast %5 : vector<1x32xf32> to vector<8x32xf32>
    %131 = arith.addf %129, %130 : vector<8x32xf32>
    %132 = vector.broadcast %28 : vector<1x32xf32> to vector<8x32xf32>
    %133 = arith.mulf %132, %17 : vector<8x32xf32>
    %134 = arith.truncf %133 : vector<8x32xf32> to vector<8x32xbf16>
    %cst_36 = arith.constant dense<0.000000e+00> : vector<8x32xf32>
    %135 = tpu.matmul %134, %0, %cst_36 {dimension_numbers = #tpu.dot_dimension_numbers<[1], [0], [0], [1], [0, 0, 1, 1], [], []>} : vector<8x32xbf16>, vector<32x32xbf16>, vector<8x32xf32> -> vector<8x32xf32>
    %136 = arith.mulf %28, %26 : vector<1x32xf32>
    %137 = arith.truncf %136 : vector<1x32xf32> to vector<1x32xbf16>
    %cst_37 = arith.constant dense<0.000000e+00> : vector<1x32xf32>
    %138 = tpu.matmul %137, %0, %cst_37 {dimension_numbers = #tpu.dot_dimension_numbers<[1], [0], [0], [1], [0, 0, 1, 1], [], []>} : vector<1x32xbf16>, vector<32x32xbf16>, vector<1x32xf32> -> vector<1x32xf32>
    %139 = arith.mulf %28, %29 : vector<1x32xf32>
    %140 = arith.truncf %139 : vector<1x32xf32> to vector<1x32xbf16>
    %cst_38 = arith.constant dense<0.000000e+00> : vector<1x32xf32>
    %141 = tpu.matmul %140, %0, %cst_38 {dimension_numbers = #tpu.dot_dimension_numbers<[1], [0], [0], [1], [0, 0, 1, 1], [], []>} : vector<1x32xbf16>, vector<32x32xbf16>, vector<1x32xf32> -> vector<1x32xf32>
    %142 = vector.broadcast %138 : vector<1x32xf32> to vector<8x32xf32>
    %143 = arith.maximumf %135, %142 : vector<8x32xf32>
    %144 = vector.broadcast %141 : vector<1x32xf32> to vector<8x32xf32>
    %145 = arith.maximumf %143, %144 : vector<8x32xf32>
    %146 = arith.subf %135, %145 : vector<8x32xf32>
    %147 = math.exp %146 : vector<8x32xf32>
    %148 = vector.broadcast %138 : vector<1x32xf32> to vector<8x32xf32>
    %149 = arith.subf %148, %145 : vector<8x32xf32>
    %150 = math.exp %149 : vector<8x32xf32>
    %151 = vector.broadcast %141 : vector<1x32xf32> to vector<8x32xf32>
    %152 = arith.subf %151, %145 : vector<8x32xf32>
    %153 = math.exp %152 : vector<8x32xf32>
    %154 = arith.addf %147, %150 : vector<8x32xf32>
    %155 = arith.addf %154, %153 : vector<8x32xf32>
    %156 = arith.mulf %147, %18 : vector<8x32xf32>
    %157 = vector.broadcast %27 : vector<1x32xf32> to vector<8x32xf32>
    %158 = arith.mulf %150, %157 : vector<8x32xf32>
    %159 = arith.addf %156, %158 : vector<8x32xf32>
    %160 = vector.broadcast %30 : vector<1x32xf32> to vector<8x32xf32>
    %161 = arith.mulf %153, %160 : vector<8x32xf32>
    %162 = arith.addf %159, %161 : vector<8x32xf32>
    %163 = tpu.reciprocal %155 {approx = true} : vector<8x32xf32> -> vector<8x32xf32>
    %164 = arith.mulf %162, %163 : vector<8x32xf32>
    %165 = arith.truncf %164 : vector<8x32xf32> to vector<8x32xbf16>
    %cst_39 = arith.constant dense<0.000000e+00> : vector<8x32xf32>
    %166 = tpu.matmul %165, %3, %cst_39 {dimension_numbers = #tpu.dot_dimension_numbers<[1], [0], [0], [1], [0, 0, 1, 1], [], []>} : vector<8x32xbf16>, vector<32x32xbf16>, vector<8x32xf32> -> vector<8x32xf32>
    %167 = vector.broadcast %5 : vector<1x32xf32> to vector<8x32xf32>
    %168 = arith.addf %166, %167 : vector<8x32xf32>
    %169 = arith.truncf %62 : vector<8x32xf32> to vector<8x32xbf16>
    %cst_40 = arith.constant dense<0.000000e+00> : vector<8x96xf32>
    %170 = tpu.matmul %169, %2, %cst_40 {dimension_numbers = #tpu.dot_dimension_numbers<[1], [0], [0], [1], [0, 0, 1, 1], [], []>} : vector<8x32xbf16>, vector<32x96xbf16>, vector<8x96xf32> -> vector<8x96xf32>
    %171 = vector.extract_strided_slice %170 {offsets = [0, 0], sizes = [8, 32], strides = [1, 1]} : vector<8x96xf32> to vector<8x32xf32>
    %172 = vector.extract_strided_slice %170 {offsets = [0, 32], sizes = [8, 32], strides = [1, 1]} : vector<8x96xf32> to vector<8x32xf32>
    %173 = vector.extract_strided_slice %170 {offsets = [0, 64], sizes = [8, 32], strides = [1, 1]} : vector<8x96xf32> to vector<8x32xf32>
    %174 = arith.truncf %94 : vector<8x32xf32> to vector<8x32xbf16>
    %cst_41 = arith.constant dense<0.000000e+00> : vector<8x96xf32>
    %175 = tpu.matmul %174, %2, %cst_41 {dimension_numbers = #tpu.dot_dimension_numbers<[1], [0], [0], [1], [0, 0, 1, 1], [], []>} : vector<8x32xbf16>, vector<32x96xbf16>, vector<8x96xf32> -> vector<8x96xf32>
    %176 = vector.extract_strided_slice %175 {offsets = [0, 0], sizes = [8, 32], strides = [1, 1]} : vector<8x96xf32> to vector<8x32xf32>
    %177 = vector.extract_strided_slice %175 {offsets = [0, 32], sizes = [8, 32], strides = [1, 1]} : vector<8x96xf32> to vector<8x32xf32>
    %178 = vector.extract_strided_slice %175 {offsets = [0, 64], sizes = [8, 32], strides = [1, 1]} : vector<8x96xf32> to vector<8x32xf32>
    %179 = arith.truncf %131 : vector<8x32xf32> to vector<8x32xbf16>
    %cst_42 = arith.constant dense<0.000000e+00> : vector<8x96xf32>
    %180 = tpu.matmul %179, %2, %cst_42 {dimension_numbers = #tpu.dot_dimension_numbers<[1], [0], [0], [1], [0, 0, 1, 1], [], []>} : vector<8x32xbf16>, vector<32x96xbf16>, vector<8x96xf32> -> vector<8x96xf32>
    %181 = vector.extract_strided_slice %180 {offsets = [0, 32], sizes = [8, 32], strides = [1, 1]} : vector<8x96xf32> to vector<8x32xf32>
    %182 = vector.extract_strided_slice %180 {offsets = [0, 64], sizes = [8, 32], strides = [1, 1]} : vector<8x96xf32> to vector<8x32xf32>
    %183 = arith.truncf %168 : vector<8x32xf32> to vector<8x32xbf16>
    %cst_43 = arith.constant dense<0.000000e+00> : vector<8x96xf32>
    %184 = tpu.matmul %183, %2, %cst_43 {dimension_numbers = #tpu.dot_dimension_numbers<[1], [0], [0], [1], [0, 0, 1, 1], [], []>} : vector<8x32xbf16>, vector<32x96xbf16>, vector<8x96xf32> -> vector<8x96xf32>
    %185 = vector.extract_strided_slice %184 {offsets = [0, 32], sizes = [8, 32], strides = [1, 1]} : vector<8x96xf32> to vector<8x32xf32>
    %186 = vector.extract_strided_slice %184 {offsets = [0, 64], sizes = [8, 32], strides = [1, 1]} : vector<8x96xf32> to vector<8x32xf32>
    %187 = arith.mulf %171, %172 : vector<8x32xf32>
    %188 = arith.truncf %187 : vector<8x32xf32> to vector<8x32xbf16>
    %cst_44 = arith.constant dense<0.000000e+00> : vector<8x32xf32>
    %189 = tpu.matmul %188, %0, %cst_44 {dimension_numbers = #tpu.dot_dimension_numbers<[1], [0], [0], [1], [0, 0, 1, 1], [], []>} : vector<8x32xbf16>, vector<32x32xbf16>, vector<8x32xf32> -> vector<8x32xf32>
    %190 = arith.mulf %171, %181 : vector<8x32xf32>
    %191 = arith.truncf %190 : vector<8x32xf32> to vector<8x32xbf16>
    %cst_45 = arith.constant dense<0.000000e+00> : vector<8x32xf32>
    %192 = tpu.matmul %191, %0, %cst_45 {dimension_numbers = #tpu.dot_dimension_numbers<[1], [0], [0], [1], [0, 0, 1, 1], [], []>} : vector<8x32xbf16>, vector<32x32xbf16>, vector<8x32xf32> -> vector<8x32xf32>
    %193 = arith.maximumf %189, %192 : vector<8x32xf32>
    %194 = arith.subf %189, %193 : vector<8x32xf32>
    %195 = math.exp %194 : vector<8x32xf32>
    %196 = arith.subf %192, %193 : vector<8x32xf32>
    %197 = math.exp %196 : vector<8x32xf32>
    %198 = arith.addf %195, %197 : vector<8x32xf32>
    %199 = arith.mulf %195, %173 : vector<8x32xf32>
    %200 = arith.mulf %197, %182 : vector<8x32xf32>
    %201 = arith.addf %199, %200 : vector<8x32xf32>
    %202 = tpu.reciprocal %198 {approx = true} : vector<8x32xf32> -> vector<8x32xf32>
    %203 = arith.mulf %201, %202 : vector<8x32xf32>
    %204 = arith.truncf %203 : vector<8x32xf32> to vector<8x32xbf16>
    %cst_46 = arith.constant dense<0.000000e+00> : vector<8x32xf32>
    %205 = tpu.matmul %204, %4, %cst_46 {dimension_numbers = #tpu.dot_dimension_numbers<[1], [0], [0], [1], [0, 0, 1, 1], [], []>} : vector<8x32xbf16>, vector<32x32xbf16>, vector<8x32xf32> -> vector<8x32xf32>
    %206 = vector.broadcast %6 : vector<1x32xf32> to vector<8x32xf32>
    %207 = arith.addf %205, %206 : vector<8x32xf32>
    %208 = arith.mulf %176, %177 : vector<8x32xf32>
    %209 = arith.truncf %208 : vector<8x32xf32> to vector<8x32xbf16>
    %cst_47 = arith.constant dense<0.000000e+00> : vector<8x32xf32>
    %210 = tpu.matmul %209, %0, %cst_47 {dimension_numbers = #tpu.dot_dimension_numbers<[1], [0], [0], [1], [0, 0, 1, 1], [], []>} : vector<8x32xbf16>, vector<32x32xbf16>, vector<8x32xf32> -> vector<8x32xf32>
    %211 = arith.mulf %176, %185 : vector<8x32xf32>
    %212 = arith.truncf %211 : vector<8x32xf32> to vector<8x32xbf16>
    %cst_48 = arith.constant dense<0.000000e+00> : vector<8x32xf32>
    %213 = tpu.matmul %212, %0, %cst_48 {dimension_numbers = #tpu.dot_dimension_numbers<[1], [0], [0], [1], [0, 0, 1, 1], [], []>} : vector<8x32xbf16>, vector<32x32xbf16>, vector<8x32xf32> -> vector<8x32xf32>
    %214 = arith.maximumf %210, %213 : vector<8x32xf32>
    %215 = arith.subf %210, %214 : vector<8x32xf32>
    %216 = math.exp %215 : vector<8x32xf32>
    %217 = arith.subf %213, %214 : vector<8x32xf32>
    %218 = math.exp %217 : vector<8x32xf32>
    %219 = arith.addf %216, %218 : vector<8x32xf32>
    %220 = arith.mulf %216, %178 : vector<8x32xf32>
    %221 = arith.mulf %218, %186 : vector<8x32xf32>
    %222 = arith.addf %220, %221 : vector<8x32xf32>
    %223 = tpu.reciprocal %219 {approx = true} : vector<8x32xf32> -> vector<8x32xf32>
    %224 = arith.mulf %222, %223 : vector<8x32xf32>
    %225 = arith.truncf %224 : vector<8x32xf32> to vector<8x32xbf16>
    %cst_49 = arith.constant dense<0.000000e+00> : vector<8x32xf32>
    %226 = tpu.matmul %225, %4, %cst_49 {dimension_numbers = #tpu.dot_dimension_numbers<[1], [0], [0], [1], [0, 0, 1, 1], [], []>} : vector<8x32xbf16>, vector<32x32xbf16>, vector<8x32xf32> -> vector<8x32xf32>
    %227 = vector.broadcast %6 : vector<1x32xf32> to vector<8x32xf32>
    %228 = arith.addf %226, %227 : vector<8x32xf32>
    %c0_50 = arith.constant 0 : index
    %c0_51 = arith.constant 0 : index
    %c0_52 = arith.constant 0 : index
    %229 = vector.load %arg12[%c0_50, %c0_51, %c0_52] : memref<1x8x32xf32, #tpu.memory_space<vmem>>, vector<1x8x32xf32>
    %230 = vector.shape_cast %229 : vector<1x8x32xf32> to vector<8x32xf32>
    %231 = vector.shape_cast %207 : vector<8x32xf32> to vector<1x8x32xf32>
    tpu.vector_store %arg12[%c0_50, %c0_51, %c0_52], %231 {strides = array<i32>} : memref<1x8x32xf32, #tpu.memory_space<vmem>>, vector<1x8x32xf32>,
    %c0_53 = arith.constant 0 : index
    %c0_54 = arith.constant 0 : index
    %c0_55 = arith.constant 0 : index
    %232 = vector.load %arg13[%c0_53, %c0_54, %c0_55] : memref<1x8x32xf32, #tpu.memory_space<vmem>>, vector<1x8x32xf32>
    %233 = vector.shape_cast %232 : vector<1x8x32xf32> to vector<8x32xf32>
    %234 = vector.shape_cast %228 : vector<8x32xf32> to vector<1x8x32xf32>
    tpu.vector_store %arg13[%c0_53, %c0_54, %c0_55], %234 {strides = array<i32>} : memref<1x8x32xf32, #tpu.memory_space<vmem>>, vector<1x8x32xf32>,
    return
  }
  func.func @transform_0(%arg0: i32, %arg1: i32) -> (i32, i32, i32) {
    %c0_i32 = arith.constant 0 : i32
    %c0_i32_0 = arith.constant 0 : i32
    return %arg0, %arg1, %c0_i32 : i32, i32, i32
  }
  func.func @transform_1(%arg0: i32, %arg1: i32) -> (i32, i32, i32) {
    %c0_i32 = arith.constant 0 : i32
    %c0_i32_0 = arith.constant 0 : i32
    return %arg0, %arg1, %c0_i32 : i32, i32, i32
  }
  func.func @transform_2(%arg0: i32, %arg1: i32) -> (i32, i32, i32) {
    %c0_i32 = arith.constant 0 : i32
    %c0_i32_0 = arith.constant 0 : i32
    %c0_i32_1 = arith.constant 0 : i32
    return %arg0, %c0_i32, %c0_i32_0 : i32, i32, i32
  }
  func.func @transform_3(%arg0: i32, %arg1: i32) -> (i32, i32) {
    %c0_i32 = arith.constant 0 : i32
    %c0_i32_0 = arith.constant 0 : i32
    %c0_i32_1 = arith.constant 0 : i32
    return %c0_i32, %c0_i32_0 : i32, i32
  }
  func.func @transform_4(%arg0: i32, %arg1: i32) -> (i32, i32) {
    %c0_i32 = arith.constant 0 : i32
    %c0_i32_0 = arith.constant 0 : i32
    %c0_i32_1 = arith.constant 0 : i32
    return %c0_i32, %c0_i32_0 : i32, i32
  }
  func.func @transform_5(%arg0: i32, %arg1: i32) -> (i32, i32) {
    %c0_i32 = arith.constant 0 : i32
    %c0_i32_0 = arith.constant 0 : i32
    %c0_i32_1 = arith.constant 0 : i32
    return %c0_i32, %c0_i32_0 : i32, i32
  }
  func.func @transform_6(%arg0: i32, %arg1: i32) -> (i32, i32) {
    %c0_i32 = arith.constant 0 : i32
    %c0_i32_0 = arith.constant 0 : i32
    %c0_i32_1 = arith.constant 0 : i32
    return %c0_i32, %c0_i32_0 : i32, i32
  }
  func.func @transform_7(%arg0: i32, %arg1: i32) -> (i32, i32) {
    %c0_i32 = arith.constant 0 : i32
    %c0_i32_0 = arith.constant 0 : i32
    %c0_i32_1 = arith.constant 0 : i32
    return %c0_i32, %c0_i32_0 : i32, i32
  }
  func.func @transform_8(%arg0: i32, %arg1: i32) -> (i32, i32) {
    %c0_i32 = arith.constant 0 : i32
    %c0_i32_0 = arith.constant 0 : i32
    %c0_i32_1 = arith.constant 0 : i32
    return %c0_i32, %c0_i32_0 : i32, i32
  }
  func.func @transform_9(%arg0: i32, %arg1: i32) -> (i32, i32) {
    %c0_i32 = arith.constant 0 : i32
    %c0_i32_0 = arith.constant 0 : i32
    %c0_i32_1 = arith.constant 0 : i32
    return %c0_i32, %c0_i32_0 : i32, i32
  }
  func.func @transform_10(%arg0: i32, %arg1: i32) -> (i32, i32, i32) {
    %c0_i32 = arith.constant 0 : i32
    %c0_i32_0 = arith.constant 0 : i32
    return %arg0, %arg1, %c0_i32 : i32, i32, i32
  }
  func.func @transform_11(%arg0: i32, %arg1: i32) -> (i32, i32, i32) {
    %c0_i32 = arith.constant 0 : i32
    %c0_i32_0 = arith.constant 0 : i32
    return %arg0, %arg1, %c0_i32 : i32, i32, i32
  }
}

</mosaic_0001>

<llo_original>
// kernel: tpu_custom_call.1
$region0: #{tpu_custom_call.1}
  #allocation0 [shape = 'u32[]', space=smem, size = 0x4, offset = 0x4, fixed_abs, tag = 'smem constant byte address 0x4 - core index']
  #allocation1 [shape = 'u32[72,128]{1,0:T(1,128)}', space=vmem, size = 0x9000, scoped, tag = 'internal scratch']
  %s0 = inlined_call_operand.hbm [shape: bf16[2,8,32], index: 0, kind: input, shape index: {}]
  %s1 = inlined_call_operand.hbm [shape: bf16[2,8,32], index: 1, kind: input, shape index: {}]
  %s2 = inlined_call_operand.hbm [shape: bf16[2,2,32], index: 2, kind: input, shape index: {}]
  %s3 = inlined_call_operand.hbm [shape: bf16[32,96], index: 3, kind: input, shape index: {}]
  %s4 = inlined_call_operand.hbm [shape: bf16[32,32], index: 4, kind: input, shape index: {}]
  %s5 = inlined_call_operand.vmem [shape: f32[1,32], index: 5, kind: input, shape index: {}]
  %s6 = inlined_call_operand.hbm [shape: bf16[32,96], index: 6, kind: input, shape index: {}]
  %s7 = inlined_call_operand.hbm [shape: bf16[32,32], index: 7, kind: input, shape index: {}]
  %s8 = inlined_call_operand.vmem [shape: f32[1,32], index: 8, kind: input, shape index: {}]
  %s9 = inlined_call_operand.hbm [shape: bf16[32,32], index: 9, kind: input, shape index: {}]
  %s10 = inlined_call_operand.hbm [shape: f32[2,8,32], index: 10, kind: output, shape index: {0}]
  %s11 = inlined_call_operand.hbm [shape: f32[2,8,32], index: 11, kind: output, shape index: {1}]
  %12 = xla_tuple %s10, %s11
  %s13 = sld [smem:[#allocation0]]
  $region113: #{tpu_custom_call.1} parent=0
    _
  %s15 = ssub.s32 1, %s13
  %s16 = scalar_select 0, %s15, %s13
  $region1: #{tpu_custom_call.1} parent=0
    #allocation2 [shape = 'u8[4096]{0}', space=vmem, size = 0x1000, scoped, tag = 'input window, operand 0']
    #allocation3 [shape = 's32[2]{0}', space=sflag, size = 0x8, scoped, tag = 'scoped memory for tpu_custom_call.1']
    #allocation4 [shape = 's32[2]{0}', space=sflag, size = 0x8, scoped, tag = 'scoped memory for tpu_custom_call.1']
    #allocation5 [shape = 'u8[4096]{0}', space=vmem, size = 0x1000, scoped, tag = 'input window, operand 1']
    #allocation6 [shape = 's32[2]{0}', space=sflag, size = 0x8, scoped, tag = 'scoped memory for tpu_custom_call.1']
    #allocation7 [shape = 'u8[1024]{0}', space=vmem, size = 0x400, scoped, tag = 'input window, operand 2']
    #allocation8 [shape = 'u8[8192]{0}', space=vmem, size = 0x2000, scoped, tag = 'input window, operand 3, single buffered']
    #allocation9 [shape = 's32[1]{0}', space=sflag, size = 0x4, scoped, tag = 'scoped memory for tpu_custom_call.1']
    #allocation10 [shape = 'u8[8192]{0}', space=vmem, size = 0x2000, scoped, tag = 'input window, operand 4, single buffered']
    #allocation11 [shape = 'u8[8192]{0}', space=vmem, size = 0x2000, scoped, tag = 'input window, operand 6, single buffered']
    #allocation12 [shape = 's32[1]{0}', space=sflag, size = 0x4, scoped, tag = 'scoped memory for tpu_custom_call.1']
    #allocation13 [shape = 'u8[8192]{0}', space=vmem, size = 0x2000, scoped, tag = 'input window, operand 7, single buffered']
    #allocation14 [shape = 'u8[8192]{0}', space=vmem, size = 0x2000, scoped, tag = 'input window, operand 9, single buffered']
    #allocation15 [shape = 's32[1]{0}', space=sflag, size = 0x4, scoped, tag = 'scoped memory for tpu_custom_call.1']
    #allocation16 [shape = 'u8[8192]{0}', space=vmem, size = 0x2000, scoped, tag = 'output window, operand 0']
    #allocation17 [shape = 'u8[8192]{0}', space=vmem, size = 0x2000, scoped, tag = 'output window, operand 1']
    #allocation18 [shape = 's32[2]{0}', space=sflag, size = 0x8, scoped, tag = 'scoped memory for tpu_custom_call.1']
    %17 = vsyncpa [#allocation3], 0
    %s18 = scalar_lea.sflag [#allocation3], 1
    %19 = vsyncpa %s18, 0
    %20 = vsyncpa [#allocation6], 0
    %s21 = scalar_lea.sflag [#allocation6], 1
    %22 = vsyncpa %s21, 0
    %23 = vsyncpa [#allocation9], 0
    %24 = vsyncpa [#allocation12], 0
    %25 = vsyncpa [#allocation15], 0
    %26 = vsyncpa [#allocation4], 0
    %s27 = scalar_lea.sflag [#allocation4], 1
    %28 = vsyncpa %s27, 0
    %29 = vsyncpa [#allocation18], 0
    %s30 = scalar_lea.sflag [#allocation18], 1
    %31 = vsyncpa %s30, 0
    loop: start=0, step=1, limit=4
    $region2: #{tpu_custom_call.1} parent=1 // loop_pre_header
      _
    $region3: #{tpu_custom_call.1} parent=1 // loop_header
      %s33 = sphi 0, %s37
      %p34 = scmp.ge.s32.totalorder %s33, 4
      %s40 = sphi 0, %s52
      %s41 = sphi 0, %s48
      %s42 = sphi 0, %s40
      %s43 = sphi 0, %s41
      %s44 = sphi 0, %s42
      %s45 = sphi 0, %s43
      %s57 = sphi 0, %s59
      %s60 = sphi 0, %s57
      %s61 = sphi 0, %s60
      %s77 = sphi 0, %s61
      %s85 = sphi 0, %s87
      %s88 = sphi 0, %s85
      %s89 = sphi 0, %s88
      %s105 = sphi 0, %s89
      %s111 = sphi 0, %s113
      %s114 = sphi 0, %s111
      %s115 = sphi 0, %s114
      %s131 = sphi 0, %s115
      %s135 = sphi 0, %s135
      %s137 = sphi 0, %s135
      %s138 = sphi 0, %s137
      %s152 = sphi 0, %s138
      %s156 = sphi 0, %s156
      %s158 = sphi 0, %s156
      %s159 = sphi 0, %s158
      %s173 = sphi 0, %s159
      %s177 = sphi 0, %s177
      %s179 = sphi 0, %s177
      %s180 = sphi 0, %s179
      %s194 = sphi 0, %s180
      %s198 = sphi 0, %s198
      %s200 = sphi 0, %s198
      %s201 = sphi 0, %s200
      %s215 = sphi 0, %s201
      %s219 = sphi 0, %s219
      %s221 = sphi 0, %s219
      %s222 = sphi 0, %s221
      %s236 = sphi 0, %s222
      %s240 = sphi 0, %s240
      %s242 = sphi 0, %s240
      %s243 = sphi 0, %s242
      %s257 = sphi 0, %s243
      %s261 = sphi 0, %s261
      %s263 = sphi 0, %s261
      %s264 = sphi 0, %s263
      %s278 = sphi 0, %s264
      %s286 = sphi 0, %s288
      %s289 = sphi 0, %s286
      %s290 = sphi 0, %s289
      %s306 = sphi 0, %s290
      %s314 = sphi 0, %s316
      %s317 = sphi 0, %s314
      %s318 = sphi 0, %s317
      %s334 = sphi 0, %s318
    $region4: #{tpu_custom_call.1} parent=1 // loop_header_branch
      %36 = sbr.rel (%p34) target = $region8
    $region5: #{tpu_custom_call.1} parent=1 // loop_body
      %s38 = ssub.s32 %s33, 1
      %s39 = ssub.s32 %s33, 2
      %s46 = sadd.s32 1, %s41
      %p47 = scmp.ge.s32.totalorder %s46, 1
      %s48 = scalar_select %p47, 0, %s46
      %s49 = sadd.s32 1, %s40
      %s50 = scalar_select %p47, %s49, %s40
      %p51 = scmp.ge.s32.totalorder %s50, 2
      %s52 = scalar_select %p51, 0, %s50
      %s53 = ssub.s32 %s40, %s52
      %s54 = ssub.s32 %s41, %s48
      %s55 = sor.u32 %s53, %s54
      %p56 = scmp.eq.s32.totalorder %s55, 0
      %s58 = sadd.s32 %s57, 1
      %s59 = scalar_select %p56, %s57, %s58
      %p62 = pneg %p56
      %p63 = scmp.eq.s32.totalorder %s33, 1
      %p64 = por %p62, %p63
      %p65 = scmp.ne.s32.totalorder %s57, %s60
      %p66 = scmp.eq.s32.totalorder %s33, 0
      %p67 = por %p65, %p66
      %p68 = scmp.ne.s32.totalorder %s57, %s60
      %p69 = scmp.eq.s32.totalorder %s38, 1
      %p70 = por %p68, %p69
      %p71 = scmp.ne.s32.totalorder %s60, %s61
      %p72 = scmp.eq.s32.totalorder %s38, 0
      %p73 = por %p71, %p72
      %p74 = scmp.ne.s32.totalorder %s60, %s61
      %p75 = scmp.eq.s32.totalorder %s39, 1
      %p76 = por %p74, %p75
      %p78 = scmp.ne.s32.totalorder %s61, %s77
      %p79 = scmp.eq.s32.totalorder %s39, 0
      %p80 = por %p78, %p79
      %s81 = ssub.s32 %s40, %s52
      %s82 = ssub.s32 %s41, %s48
      %s83 = sor.u32 %s81, %s82
      %p84 = scmp.eq.s32.totalorder %s83, 0
      %s86 = sadd.s32 %s85, 1
      %s87 = scalar_select %p84, %s85, %s86
      %p90 = pneg %p84
      %p91 = scmp.eq.s32.totalorder %s33, 1
      %p92 = por %p90, %p91
      %p93 = scmp.ne.s32.totalorder %s85, %s88
      %p94 = scmp.eq.s32.totalorder %s33, 0
      %p95 = por %p93, %p94
      %p96 = scmp.ne.s32.totalorder %s85, %s88
      %p97 = scmp.eq.s32.totalorder %s38, 1
      %p98 = por %p96, %p97
      %p99 = scmp.ne.s32.totalorder %s88, %s89
      %p100 = scmp.eq.s32.totalorder %s38, 0
      %p101 = por %p99, %p100
      %p102 = scmp.ne.s32.totalorder %s88, %s89
      %p103 = scmp.eq.s32.totalorder %s39, 1
      %p104 = por %p102, %p103
      %p106 = scmp.ne.s32.totalorder %s89, %s105
      %p107 = scmp.eq.s32.totalorder %s39, 0
      %p108 = por %p106, %p107
      %s109 = ssub.s32 %s40, %s52
      %p110 = scmp.eq.s32.totalorder %s109, 0
      %s112 = sadd.s32 %s111, 1
      %s113 = scalar_select %p110, %s111, %s112
      %p116 = pneg %p110
      %p117 = scmp.eq.s32.totalorder %s33, 1
      %p118 = por %p116, %p117
      %p119 = scmp.ne.s32.totalorder %s111, %s114
      %p120 = scmp.eq.s32.totalorder %s33, 0
      %p121 = por %p119, %p120
      %p122 = scmp.ne.s32.totalorder %s111, %s114
      %p123 = scmp.eq.s32.totalorder %s38, 1
      %p124 = por %p122, %p123
      %p125 = scmp.ne.s32.totalorder %s114, %s115
      %p126 = scmp.eq.s32.totalorder %s38, 0
      %p127 = por %p125, %p126
      %p128 = scmp.ne.s32.totalorder %s114, %s115
      %p129 = scmp.eq.s32.totalorder %s39, 1
      %p130 = por %p128, %p129
      %p132 = scmp.ne.s32.totalorder %s115, %s131
      %p133 = scmp.eq.s32.totalorder %s39, 0
      %p134 = por %p132, %p133
      %s136 = sadd.s32 %s135, 1
      %p139 = scmp.eq.s32.totalorder %s33, 1
      %p140 = scmp.ne.s32.totalorder %s135, %s137
      %p141 = scmp.eq.s32.totalorder %s33, 0
      %p142 = por %p140, %p141
      %p143 = scmp.ne.s32.totalorder %s135, %s137
      %p144 = scmp.eq.s32.totalorder %s38, 1
      %p145 = por %p143, %p144
      %p146 = scmp.ne.s32.totalorder %s137, %s138
      %p147 = scmp.eq.s32.totalorder %s38, 0
      %p148 = por %p146, %p147
      %p149 = scmp.ne.s32.totalorder %s137, %s138
      %p150 = scmp.eq.s32.totalorder %s39, 1
      %p151 = por %p149, %p150
      %p153 = scmp.ne.s32.totalorder %s138, %s152
      %p154 = scmp.eq.s32.totalorder %s39, 0
      %p155 = por %p153, %p154
      %s157 = sadd.s32 %s156, 1
      %p160 = scmp.eq.s32.totalorder %s33, 1
      %p161 = scmp.ne.s32.totalorder %s156, %s158
      %p162 = scmp.eq.s32.totalorder %s33, 0
      %p163 = por %p161, %p162
      %p164 = scmp.ne.s32.totalorder %s156, %s158
      %p165 = scmp.eq.s32.totalorder %s38, 1
      %p166 = por %p164, %p165
      %p167 = scmp.ne.s32.totalorder %s158, %s159
      %p168 = scmp.eq.s32.totalorder %s38, 0
      %p169 = por %p167, %p168
      %p170 = scmp.ne.s32.totalorder %s158, %s159
      %p171 = scmp.eq.s32.totalorder %s39, 1
      %p172 = por %p170, %p171
      %p174 = scmp.ne.s32.totalorder %s159, %s173
      %p175 = scmp.eq.s32.totalorder %s39, 0
      %p176 = por %p174, %p175
      %s178 = sadd.s32 %s177, 1
      %p181 = scmp.eq.s32.totalorder %s33, 1
      %p182 = scmp.ne.s32.totalorder %s177, %s179
      %p183 = scmp.eq.s32.totalorder %s33, 0
      %p184 = por %p182, %p183
      %p185 = scmp.ne.s32.totalorder %s177, %s179
      %p186 = scmp.eq.s32.totalorder %s38, 1
      %p187 = por %p185, %p186
      %p188 = scmp.ne.s32.totalorder %s179, %s180
      %p189 = scmp.eq.s32.totalorder %s38, 0
      %p190 = por %p188, %p189
      %p191 = scmp.ne.s32.totalorder %s179, %s180
      %p192 = scmp.eq.s32.totalorder %s39, 1
      %p193 = por %p191, %p192
      %p195 = scmp.ne.s32.totalorder %s180, %s194
      %p196 = scmp.eq.s32.totalorder %s39, 0
      %p197 = por %p195, %p196
      %s199 = sadd.s32 %s198, 1
      %p202 = scmp.eq.s32.totalorder %s33, 1
      %p203 = scmp.ne.s32.totalorder %s198, %s200
      %p204 = scmp.eq.s32.totalorder %s33, 0
      %p205 = por %p203, %p204
      %p206 = scmp.ne.s32.totalorder %s198, %s200
      %p207 = scmp.eq.s32.totalorder %s38, 1
      %p208 = por %p206, %p207
      %p209 = scmp.ne.s32.totalorder %s200, %s201
      %p210 = scmp.eq.s32.totalorder %s38, 0
      %p211 = por %p209, %p210
      %p212 = scmp.ne.s32.totalorder %s200, %s201
      %p213 = scmp.eq.s32.totalorder %s39, 1
      %p214 = por %p212, %p213
      %p216 = scmp.ne.s32.totalorder %s201, %s215
      %p217 = scmp.eq.s32.totalorder %s39, 0
      %p218 = por %p216, %p217
      %s220 = sadd.s32 %s219, 1
      %p223 = scmp.eq.s32.totalorder %s33, 1
      %p224 = scmp.ne.s32.totalorder %s219, %s221
      %p225 = scmp.eq.s32.totalorder %s33, 0
      %p226 = por %p224, %p225
      %p227 = scmp.ne.s32.totalorder %s219, %s221
      %p228 = scmp.eq.s32.totalorder %s38, 1
      %p229 = por %p227, %p228
      %p230 = scmp.ne.s32.totalorder %s221, %s222
      %p231 = scmp.eq.s32.totalorder %s38, 0
      %p232 = por %p230, %p231
      %p233 = scmp.ne.s32.totalorder %s221, %s222
      %p234 = scmp.eq.s32.totalorder %s39, 1
      %p235 = por %p233, %p234
      %p237 = scmp.ne.s32.totalorder %s222, %s236
      %p238 = scmp.eq.s32.totalorder %s39, 0
      %p239 = por %p237, %p238
      %s241 = sadd.s32 %s240, 1
      %p244 = scmp.eq.s32.totalorder %s33, 1
      %p245 = scmp.ne.s32.totalorder %s240, %s242
      %p246 = scmp.eq.s32.totalorder %s33, 0
      %p247 = por %p245, %p246
      %p248 = scmp.ne.s32.totalorder %s240, %s242
      %p249 = scmp.eq.s32.totalorder %s38, 1
      %p250 = por %p248, %p249
      %p251 = scmp.ne.s32.totalorder %s242, %s243
      %p252 = scmp.eq.s32.totalorder %s38, 0
      %p253 = por %p251, %p252
      %p254 = scmp.ne.s32.totalorder %s242, %s243
      %p255 = scmp.eq.s32.totalorder %s39, 1
      %p256 = por %p254, %p255
      %p258 = scmp.ne.s32.totalorder %s243, %s257
      %p259 = scmp.eq.s32.totalorder %s39, 0
      %p260 = por %p258, %p259
      %s262 = sadd.s32 %s261, 1
      %p265 = scmp.eq.s32.totalorder %s33, 1
      %p266 = scmp.ne.s32.totalorder %s261, %s263
      %p267 = scmp.eq.s32.totalorder %s33, 0
      %p268 = por %p266, %p267
      %p269 = scmp.ne.s32.totalorder %s261, %s263
      %p270 = scmp.eq.s32.totalorder %s38, 1
      %p271 = por %p269, %p270
      %p272 = scmp.ne.s32.totalorder %s263, %s264
      %p273 = scmp.eq.s32.totalorder %s38, 0
      %p274 = por %p272, %p273
      %p275 = scmp.ne.s32.totalorder %s263, %s264
      %p276 = scmp.eq.s32.totalorder %s39, 1
      %p277 = por %p275, %p276
      %p279 = scmp.ne.s32.totalorder %s264, %s278
      %p280 = scmp.eq.s32.totalorder %s39, 0
      %p281 = por %p279, %p280
      %s282 = ssub.s32 %s40, %s52
      %s283 = ssub.s32 %s41, %s48
      %s284 = sor.u32 %s282, %s283
      %p285 = scmp.eq.s32.totalorder %s284, 0
      %s287 = sadd.s32 %s286, 1
      %s288 = scalar_select %p285, %s286, %s287
      %p291 = pneg %p285
      %p292 = scmp.eq.s32.totalorder %s33, 1
      %p293 = por %p291, %p292
      %p294 = scmp.ne.s32.totalorder %s286, %s289
      %p295 = scmp.eq.s32.totalorder %s33, 0
      %p296 = por %p294, %p295
      %p297 = scmp.ne.s32.totalorder %s286, %s289
      %p298 = scmp.eq.s32.totalorder %s38, 1
      %p299 = por %p297, %p298
      %p300 = scmp.ne.s32.totalorder %s289, %s290
      %p301 = scmp.eq.s32.totalorder %s38, 0
      %p302 = por %p300, %p301
      %p303 = scmp.ne.s32.totalorder %s289, %s290
      %p304 = scmp.eq.s32.totalorder %s39, 1
      %p305 = por %p303, %p304
      %p307 = scmp.ne.s32.totalorder %s290, %s306
      %p308 = scmp.eq.s32.totalorder %s39, 0
      %p309 = por %p307, %p308
      %s310 = ssub.s32 %s40, %s52
      %s311 = ssub.s32 %s41, %s48
      %s312 = sor.u32 %s310, %s311
      %p313 = scmp.eq.s32.totalorder %s312, 0
      %s315 = sadd.s32 %s314, 1
      %s316 = scalar_select %p313, %s314, %s315
      %p319 = pneg %p313
      %p320 = scmp.eq.s32.totalorder %s33, 1
      %p321 = por %p319, %p320
      %p322 = scmp.ne.s32.totalorder %s314, %s317
      %p323 = scmp.eq.s32.totalorder %s33, 0
      %p324 = por %p322, %p323
      %p325 = scmp.ne.s32.totalorder %s314, %s317
      %p326 = scmp.eq.s32.totalorder %s38, 1
      %p327 = por %p325, %p326
      %p328 = scmp.ne.s32.totalorder %s317, %s318
      %p329 = scmp.eq.s32.totalorder %s38, 0
      %p330 = por %p328, %p329
      %p331 = scmp.ne.s32.totalorder %s317, %s318
      %p332 = scmp.eq.s32.totalorder %s39, 1
      %p333 = por %p331, %p332
      %p335 = scmp.ne.s32.totalorder %s318, %s334
      %p336 = scmp.eq.s32.totalorder %s39, 0
      %p337 = por %p335, %p336
      %p338 = scmp.le.s32.totalorder 1, %s33
      %p339 = scmp.lt.s32.totalorder %s33, 3
      %p340 = pnand %p338, %p339
      %p341 = pneg %p340
      // Predicated region
      $region9: #{tpu_custom_call.1} parent=5 // pred_check
        _
      $region10: #{tpu_custom_call.1} parent=5 // pred_check_branch
        %343 = sbr.rel (%p340) target = $region12
      $region11: #{tpu_custom_call.1} parent=5 // pred_region
        %s344 = ssub.s32 %s33, 1
        // Predicated region
        $region13: #{tpu_custom_call.1} parent=11 // pred_check
          %p345 = pneg %p148
        $region14: #{tpu_custom_call.1} parent=11 // pred_check_branch
          %347 = sbr.rel (%p345) target = $region16
        $region15: #{tpu_custom_call.1} parent=11 // pred_region
          %349 = vsyncadd [#allocation9], 0
          %s350 = sshll.u32 %s3, 4
          %s351 = int_to_ptr.hbm [resolvable:$true] %s350
          %s352 = sshll.u32 [#allocation8], 4
          %s353 = int_to_ptr.vmem [resolvable:$true] %s352
          %358 = dma.hbm_to_vmem [thread:$0]  %s351, 256, %s353, [#allocation9], 64, 64, 4
        $region16: #{tpu_custom_call.1} parent=11 // pred_fallthru
          _
        // Predicated region
        $region17: #{tpu_custom_call.1} parent=11 // pred_check
          %p359 = pneg %p169
        $region18: #{tpu_custom_call.1} parent=11 // pred_check_branch
          %361 = sbr.rel (%p359) target = $region20
        $region19: #{tpu_custom_call.1} parent=11 // pred_region
          %363 = vsyncadd [#allocation9], 0
          %s364 = sshll.u32 %s4, 4
          %s365 = int_to_ptr.hbm [resolvable:$true] %s364
          %s366 = sshll.u32 [#allocation10], 4
          %s367 = int_to_ptr.vmem [resolvable:$true] %s366
          %372 = dma.hbm_to_vmem [thread:$0]  %s365, 256, %s367, [#allocation9], 64, 64, 4
        $region20: #{tpu_custom_call.1} parent=11 // pred_fallthru
          _
        // Predicated region
        $region21: #{tpu_custom_call.1} parent=11 // pred_check
          %p373 = pneg %p190
        $region22: #{tpu_custom_call.1} parent=11 // pred_check_branch
          %375 = sbr.rel (%p373) target = $region24
        $region23: #{tpu_custom_call.1} parent=11 // pred_region
          _
        $region24: #{tpu_custom_call.1} parent=11 // pred_fallthru
          _
        // Predicated region
        $region25: #{tpu_custom_call.1} parent=11 // pred_check
          %p376 = pneg %p211
        $region26: #{tpu_custom_call.1} parent=11 // pred_check_branch
          %378 = sbr.rel (%p376) target = $region28
        $region27: #{tpu_custom_call.1} parent=11 // pred_region
          %380 = vsyncadd [#allocation12], 0
          %s381 = sshll.u32 %s6, 4
          %s382 = int_to_ptr.hbm [resolvable:$true] %s381
          %s383 = sshll.u32 [#allocation11], 4
          %s384 = int_to_ptr.vmem [resolvable:$true] %s383
          %389 = dma.hbm_to_vmem [thread:$0]  %s382, 256, %s384, [#allocation12], 64, 64, 4
        $region28: #{tpu_custom_call.1} parent=11 // pred_fallthru
          _
        // Predicated region
        $region29: #{tpu_custom_call.1} parent=11 // pred_check
          %p390 = pneg %p232
        $region30: #{tpu_custom_call.1} parent=11 // pred_check_branch
          %392 = sbr.rel (%p390) target = $region32
        $region31: #{tpu_custom_call.1} parent=11 // pred_region
          %394 = vsyncadd [#allocation12], 0
          %s395 = sshll.u32 %s7, 4
          %s396 = int_to_ptr.hbm [resolvable:$true] %s395
          %s397 = sshll.u32 [#allocation13], 4
          %s398 = int_to_ptr.vmem [resolvable:$true] %s397
          %403 = dma.hbm_to_vmem [thread:$0]  %s396, 256, %s398, [#allocation12], 64, 64, 4
        $region32: #{tpu_custom_call.1} parent=11 // pred_fallthru
          _
        // Predicated region
        $region33: #{tpu_custom_call.1} parent=11 // pred_check
          %p404 = pneg %p253
        $region34: #{tpu_custom_call.1} parent=11 // pred_check_branch
          %406 = sbr.rel (%p404) target = $region36
        $region35: #{tpu_custom_call.1} parent=11 // pred_region
          _
        $region36: #{tpu_custom_call.1} parent=11 // pred_fallthru
          _
        // Predicated region
        $region37: #{tpu_custom_call.1} parent=11 // pred_check
          %p407 = pneg %p274
        $region38: #{tpu_custom_call.1} parent=11 // pred_check_branch
          %409 = sbr.rel (%p407) target = $region40
        $region39: #{tpu_custom_call.1} parent=11 // pred_region
          %411 = vsyncadd [#allocation15], 0
          %s412 = sshll.u32 %s9, 4
          %s413 = int_to_ptr.hbm [resolvable:$true] %s412
          %s414 = sshll.u32 [#allocation14], 4
          %s415 = int_to_ptr.vmem [resolvable:$true] %s414
          %420 = dma.hbm_to_vmem [thread:$0]  %s413, 256, %s415, [#allocation15], 64, 64, 4
        $region40: #{tpu_custom_call.1} parent=11 // pred_fallthru
          _
      $region12: #{tpu_custom_call.1} parent=5 // pred_fallthru
        _
      %p421 = scmp.lt.s32.totalorder %s33, 2
      // Predicated region
      $region41: #{tpu_custom_call.1} parent=5 // pred_check
        %p422 = pneg %p421
      $region42: #{tpu_custom_call.1} parent=5 // pred_check_branch
        %424 = sbr.rel (%p422) target = $region44
      $region43: #{tpu_custom_call.1} parent=5 // pred_region
        // Predicated region
        $region45: #{tpu_custom_call.1} parent=43 // pred_check
          %p425 = pneg %p67
        $region46: #{tpu_custom_call.1} parent=43 // pred_check_branch
          %427 = sbr.rel (%p425) target = $region48
        $region47: #{tpu_custom_call.1} parent=43 // pred_region
          %s428 = sand.u32 %s57, 1
          %s429 = scalar_lea.sflag [#allocation3], %s428
          %s430 = sand.u32 %s57, 1
          %s431 = smul.addr %s430, 4
          %s432 = scalar_lea.vmem [#allocation2], %s431
          %434 = vsyncadd %s429, 0
          %s435 = sadd.s32 %s41, %s40
          %s436 = smul.addr %s435, 4
          %s437 = scalar_lea.hbm %s0, %s436
          %s439 = sshll.u32 %s437, 4
          %s440 = int_to_ptr.hbm [resolvable:$true] %s439
          %s441 = sshll.u32 %s432, 4
          %s442 = int_to_ptr.vmem [resolvable:$true] %s441
          %444 = dma.hbm_to_vmem [thread:$0]  %s440, 64, %s442, %s429
        $region48: #{tpu_custom_call.1} parent=43 // pred_fallthru
          _
        // Predicated region
        $region49: #{tpu_custom_call.1} parent=43 // pred_check
          %p445 = pneg %p95
        $region50: #{tpu_custom_call.1} parent=43 // pred_check_branch
          %447 = sbr.rel (%p445) target = $region52
        $region51: #{tpu_custom_call.1} parent=43 // pred_region
          %s448 = sand.u32 %s33, 1
          %s449 = scalar_lea.sflag [#allocation6], %s448
          %s450 = sand.u32 %s85, 1
          %s451 = smul.addr %s450, 4
          %s452 = scalar_lea.vmem [#allocation5], %s451
          %454 = vsyncadd %s449, 0
          %s455 = sadd.s32 %s41, %s40
          %s456 = smul.addr %s455, 4
          %s457 = scalar_lea.hbm %s1, %s456
          %s459 = sshll.u32 %s457, 4
          %s460 = int_to_ptr.hbm [resolvable:$true] %s459
          %s461 = sshll.u32 %s452, 4
          %s462 = int_to_ptr.vmem [resolvable:$true] %s461
          %464 = dma.hbm_to_vmem [thread:$0]  %s460, 64, %s462, %s449
        $region52: #{tpu_custom_call.1} parent=43 // pred_fallthru
          _
        // Predicated region
        $region53: #{tpu_custom_call.1} parent=43 // pred_check
          %p465 = pneg %p121
        $region54: #{tpu_custom_call.1} parent=43 // pred_check_branch
          %467 = sbr.rel (%p465) target = $region56
        $region55: #{tpu_custom_call.1} parent=43 // pred_region
          %s468 = sand.u32 %s33, 1
          %s469 = scalar_lea.sflag [#allocation6], %s468
          %s470 = sand.u32 %s111, 1
          %s471 = scalar_lea.vmem [#allocation7], %s470
          %473 = vsyncadd %s469, 0
          %s474 = scalar_lea.hbm %s2, %s40
          %s476 = sshll.u32 %s474, 4
          %s477 = int_to_ptr.hbm [resolvable:$true] %s476
          %s478 = sshll.u32 %s471, 4
          %s479 = int_to_ptr.vmem [resolvable:$true] %s478
          %481 = dma.hbm_to_vmem [thread:$0]  %s477, 16, %s479, %s469
        $region56: #{tpu_custom_call.1} parent=43 // pred_fallthru
          _
      $region44: #{tpu_custom_call.1} parent=5 // pred_fallthru
        _
      %p482 = scmp.le.s32.totalorder 1, %s33
      %p483 = scmp.lt.s32.totalorder %s33, 3
      %p484 = pnand %p482, %p483
      %p485 = pneg %p484
      // Predicated region
      $region57: #{tpu_custom_call.1} parent=5 // pred_check
        _
      $region58: #{tpu_custom_call.1} parent=5 // pred_check_branch
        %487 = sbr.rel (%p484) target = $region60
      $region59: #{tpu_custom_call.1} parent=5 // pred_region
        %s488 = ssub.s32 %s33, 1
        %s489 = sand.u32 %s60, 1
        %s490 = scalar_lea.sflag [#allocation3], %s489
        %s491 = sand.u32 %s60, 1
        %s492 = smul.addr %s491, 4
        %s493 = scalar_lea.vmem [#allocation2], %s492
        // Predicated region
        $region61: #{tpu_custom_call.1} parent=59 // pred_check
          %p494 = pneg %p73
        $region62: #{tpu_custom_call.1} parent=59 // pred_check_branch
          %496 = sbr.rel (%p494) target = $region64
        $region63: #{tpu_custom_call.1} parent=59 // pred_region
          %498 = dma.done %s490, 64
        $region64: #{tpu_custom_call.1} parent=59 // pred_fallthru
          _
        %s499 = sand.u32 %s38, 1
        %s500 = scalar_lea.sflag [#allocation6], %s499
        %s501 = sand.u32 %s88, 1
        %s502 = smul.addr %s501, 4
        %s503 = scalar_lea.vmem [#allocation5], %s502
        // Predicated region
        $region65: #{tpu_custom_call.1} parent=59 // pred_check
          %p504 = pneg %p101
        $region66: #{tpu_custom_call.1} parent=59 // pred_check_branch
          %506 = sbr.rel (%p504) target = $region68
        $region67: #{tpu_custom_call.1} parent=59 // pred_region
          %508 = dma.done %s500, 64
        $region68: #{tpu_custom_call.1} parent=59 // pred_fallthru
          _
        %s509 = sand.u32 %s38, 1
        %s510 = scalar_lea.sflag [#allocation6], %s509
        %s511 = sand.u32 %s114, 1
        %s512 = scalar_lea.vmem [#allocation7], %s511
        // Predicated region
        $region69: #{tpu_custom_call.1} parent=59 // pred_check
          %p513 = pneg %p127
        $region70: #{tpu_custom_call.1} parent=59 // pred_check_branch
          %515 = sbr.rel (%p513) target = $region72
        $region71: #{tpu_custom_call.1} parent=59 // pred_region
          %517 = dma.done %s510, 16
        $region72: #{tpu_custom_call.1} parent=59 // pred_fallthru
          _
        // Predicated region
        $region73: #{tpu_custom_call.1} parent=59 // pred_check
          %p518 = pneg %p148
        $region74: #{tpu_custom_call.1} parent=59 // pred_check_branch
          %520 = sbr.rel (%p518) target = $region76
        $region75: #{tpu_custom_call.1} parent=59 // pred_region
          %522 = dma.done [#allocation9], 256
        $region76: #{tpu_custom_call.1} parent=59 // pred_fallthru
          _
        // Predicated region
        $region77: #{tpu_custom_call.1} parent=59 // pred_check
          %p523 = pneg %p169
        $region78: #{tpu_custom_call.1} parent=59 // pred_check_branch
          %525 = sbr.rel (%p523) target = $region80
        $region79: #{tpu_custom_call.1} parent=59 // pred_region
          %527 = dma.done [#allocation9], 256
        $region80: #{tpu_custom_call.1} parent=59 // pred_fallthru
          _
        // Predicated region
        $region81: #{tpu_custom_call.1} parent=59 // pred_check
          %p528 = pneg %p211
        $region82: #{tpu_custom_call.1} parent=59 // pred_check_branch
          %530 = sbr.rel (%p528) target = $region84
        $region83: #{tpu_custom_call.1} parent=59 // pred_region
          %532 = dma.done [#allocation12], 256
        $region84: #{tpu_custom_call.1} parent=59 // pred_fallthru
          _
        // Predicated region
        $region85: #{tpu_custom_call.1} parent=59 // pred_check
          %p533 = pneg %p232
        $region86: #{tpu_custom_call.1} parent=59 // pred_check_branch
          %535 = sbr.rel (%p533) target = $region88
        $region87: #{tpu_custom_call.1} parent=59 // pred_region
          %537 = dma.done [#allocation12], 256
        $region88: #{tpu_custom_call.1} parent=59 // pred_fallthru
          _
        // Predicated region
        $region89: #{tpu_custom_call.1} parent=59 // pred_check
          %p538 = pneg %p274
        $region90: #{tpu_custom_call.1} parent=59 // pred_check_branch
          %540 = sbr.rel (%p538) target = $region92
        $region91: #{tpu_custom_call.1} parent=59 // pred_region
          %542 = dma.done [#allocation15], 256
        $region92: #{tpu_custom_call.1} parent=59 // pred_fallthru
          _
        %s543 = sand.u32 %s60, 1
        %s544 = scalar_lea.sflag [#allocation3], %s543
        %s545 = sand.u32 %s60, 1
        %s546 = smul.addr %s545, 4
        %s547 = scalar_lea.vmem [#allocation2], %s546
        %p548 = pneg %p73
        %p549 = pneg %p70
        %s550 = sand.u32 %s38, 1
        %s551 = scalar_lea.sflag [#allocation6], %s550
        %s552 = sand.u32 %s88, 1
        %s553 = smul.addr %s552, 4
        %s554 = scalar_lea.vmem [#allocation5], %s553
        %p555 = pneg %p101
        %p556 = pneg %p98
        %s557 = sand.u32 %s38, 1
        %s558 = scalar_lea.sflag [#allocation6], %s557
        %s559 = sand.u32 %s114, 1
        %s560 = scalar_lea.vmem [#allocation7], %s559
        %p561 = pneg %p127
        %p562 = pneg %p124
        %p563 = pneg %p148
        %p564 = pneg %p145
        %p565 = pneg %p169
        %p566 = pneg %p166
        %p567 = pneg %p190
        %p568 = pneg %p187
        %p569 = pneg %p211
        %p570 = pneg %p208
        %p571 = pneg %p232
        %p572 = pneg %p229
        %p573 = pneg %p253
        %p574 = pneg %p250
        %p575 = pneg %p274
        %p576 = pneg %p271
        %p577 = pneg %p302
        %p578 = pneg %p299
        %s579 = sand.u32 %s289, 1
        %s580 = scalar_lea.sflag [#allocation4], %s579
        %s581 = sand.u32 %s289, 1
        %s582 = smul.addr %s581, 8
        %s583 = scalar_lea.vmem [#allocation16], %s582
        %p584 = pneg %p330
        %p585 = pneg %p327
        %s586 = sand.u32 %s317, 1
        %s587 = scalar_lea.sflag [#allocation18], %s586
        %s588 = sand.u32 %s317, 1
        %s589 = smul.addr %s588, 8
        %s590 = scalar_lea.vmem [#allocation17], %s589
        %v592 = vld [vmem:[#allocation14] sm:$0xf]
        %v593 = vld [vmem:[#allocation14 + $0x4] sm:$0xf]
        %v594 = vld [vmem:[#allocation14 + $0x8] sm:$0xf]
        %v595 = vld [vmem:[#allocation14 + $0xc] sm:$0xf]
        %v596 = vld [vmem:[#allocation8] sm:$0xf]
        %v597 = vld [vmem:[#allocation8 + $0x4] sm:$0xf]
        %v598 = vld [vmem:[#allocation8 + $0x8] sm:$0xf]
        %v599 = vld [vmem:[#allocation8 + $0xc] sm:$0xf]
        %v600 = vld [vmem:[#allocation11] sm:$0xf]
        %v601 = vld [vmem:[#allocation11 + $0x4] sm:$0xf]
        %v602 = vld [vmem:[#allocation11 + $0x8] sm:$0xf]
        %v603 = vld [vmem:[#allocation11 + $0xc] sm:$0xf]
        %v604 = vld [vmem:[#allocation10] sm:$0xf]
        %v605 = vld [vmem:[#allocation10 + $0x4] sm:$0xf]
        %v606 = vld [vmem:[#allocation10 + $0x8] sm:$0xf]
        %v607 = vld [vmem:[#allocation10 + $0xc] sm:$0xf]
        %v608 = vld [vmem:[#allocation13] sm:$0xf]
        %v609 = vld [vmem:[#allocation13 + $0x4] sm:$0xf]
        %v610 = vld [vmem:[#allocation13 + $0x8] sm:$0xf]
        %v611 = vld [vmem:[#allocation13 + $0xc] sm:$0xf]
        %v612 = vld [vmem:[%s5] sm:$0x1]
        %v613 = vld [vmem:[%s8] sm:$0x1]
        %v614 = vld [vmem:[%s493] sm:$0xf]
        %v619 = vunpack.c.l.b16 %v596
        %v620 = vunpack.c.l.b16 %v597
        %v621 = vunpack.c.l.b16 %v598
        %v622 = vunpack.c.l.b16 %v599
        %v623 = vpack.c.b16 %v620, %v619
        %v624 = vpack.c.b16 %v622, %v621
        %vm627 = vcmask 261120
        %v629 = vsel %vm627, %v614, 0
        %631 = vmatpush.bf16.msra.mxu0 0
        %632 = vmatpush.bf16.msra.mxu0 0
        %633 = vmatpush.bf16.msra.mxu0 0
        %634 = vmatpush.bf16.msra.mxu0 0
        %635 = vmatpush.bf16.msra.mxu0 0
        %636 = vmatpush.bf16.msra.mxu0 0
        %637 = vmatpush.bf16.msra.mxu0 %v624
        %638 = vmatpush.bf16.msra.mxu0 %v623
        %639 = vmatmul.bf16.gmra.mxu0 %v629
        %v640 = vpop.f32.mrf.mxu0
        %v641 = vadd.f32 0.0, %v640
        %v642 = vpop.f32.mrf.mxu0
        %643 = vdwg.mxu0
        %v644 = vld [vmem:[%s503] sm:$0xf]
        %v646 = vsel %vm627, %v644, 0
        %648 = vmatpush.bf16.msra.mxu0 0
        %649 = vmatpush.bf16.msra.mxu0 0
        %650 = vmatpush.bf16.msra.mxu0 0
        %651 = vmatpush.bf16.msra.mxu0 0
        %652 = vmatpush.bf16.msra.mxu0 0
        %653 = vmatpush.bf16.msra.mxu0 0
        %654 = vmatpush.bf16.msra.mxu0 %v624
        %655 = vmatpush.bf16.msra.mxu0 %v623
        %656 = vmatmul.bf16.gmra.mxu0 %v646
        %v657 = vpop.f32.mrf.mxu0
        %v658 = vadd.f32 0.0, %v657
        %v659 = vpop.f32.mrf.mxu0
        %660 = vdwg.mxu0
        %v661 = vld [vmem:[%s512] sm:$0x1]
        %v663 = vsel %vm627, %v661, 0
        %665 = vmatpush.bf16.msra.mxu0 0
        %666 = vmatpush.bf16.msra.mxu0 0
        %667 = vmatpush.bf16.msra.mxu0 0
        %668 = vmatpush.bf16.msra.mxu0 0
        %669 = vmatpush.bf16.msra.mxu0 0
        %670 = vmatpush.bf16.msra.mxu0 0
        %671 = vmatpush.bf16.msra.mxu0 %v624
        %672 = vmatpush.bf16.msra.mxu0 %v623
        %673 = vmatmul.bf16.gmra.mxu0 %v663
        %v674 = vpop.f32.mrf.mxu0
        %v675 = vadd.f32 0.0, %v674
        %v676 = vpop.f32.mrf.mxu0
        %677 = vdwg.mxu0
        %679 = vrot.lane.b32.xlu0 %v641, 96
        %v680 = vpop.permute.xlu0 %679
        %v682 = vmul.f32 %v641, %v680
        %v683 = vpack.c.bf16 %v682, %v682
        %v688 = vunpack.c.l.b16 %v592
        %v689 = vunpack.c.l.b16 %v593
        %v690 = vunpack.c.l.b16 %v594
        %v691 = vunpack.c.l.b16 %v595
        %v692 = vpack.c.b16 %v689, %v688
        %v693 = vpack.c.b16 %v691, %v690
        %v697 = vsel %vm627, %v683, 0
        %699 = vmatpush.bf16.msra.mxu0 0
        %700 = vmatpush.bf16.msra.mxu0 0
        %701 = vmatpush.bf16.msra.mxu0 0
        %702 = vmatpush.bf16.msra.mxu0 0
        %703 = vmatpush.bf16.msra.mxu0 0
        %704 = vmatpush.bf16.msra.mxu0 0
        %705 = vmatpush.bf16.msra.mxu0 %v693
        %706 = vmatpush.bf16.msra.mxu0 %v692
        %707 = vmatmul.bf16.gmra.mxu0 %v697
        %v708 = vpop.f32.mrf.mxu0
        %v709 = vadd.f32 0.0, %v708
        %v710 = vpop.f32.mrf.mxu0
        %711 = vdwg.mxu0
        %713 = vrot.lane.b32.xlu0 %v658, 96
        %v714 = vpop.permute.xlu0 %713
        %v716 = vmul.f32 %v641, %v714
        %v717 = vpack.c.bf16 %v716, %v716
        %v719 = vsel %vm627, %v717, 0
        %721 = vmatpush.bf16.msra.mxu0 0
        %722 = vmatpush.bf16.msra.mxu0 0
        %723 = vmatpush.bf16.msra.mxu0 0
        %724 = vmatpush.bf16.msra.mxu0 0
        %725 = vmatpush.bf16.msra.mxu0 0
        %726 = vmatpush.bf16.msra.mxu0 0
        %727 = vmatpush.bf16.msra.mxu0 %v693
        %728 = vmatpush.bf16.msra.mxu0 %v692
        %729 = vmatmul.bf16.gmra.mxu0 %v719
        %v730 = vpop.f32.mrf.mxu0
        %v731 = vadd.f32 0.0, %v730
        %v732 = vpop.f32.mrf.mxu0
        %733 = vdwg.mxu0
        %v734 = vperm.slane %v675, 0
        %736 = vrot.lane.b32.xlu0 %v734, 96
        %v737 = vpop.permute.xlu0 %736
        %v739 = vmul.f32 %v641, %v737
        %v740 = vpack.c.bf16 %v739, %v739
        %v742 = vsel %vm627, %v740, 0
        %744 = vmatpush.bf16.msra.mxu0 0
        %745 = vmatpush.bf16.msra.mxu0 0
        %746 = vmatpush.bf16.msra.mxu0 0
        %747 = vmatpush.bf16.msra.mxu0 0
        %748 = vmatpush.bf16.msra.mxu0 0
        %749 = vmatpush.bf16.msra.mxu0 0
        %750 = vmatpush.bf16.msra.mxu0 %v693
        %751 = vmatpush.bf16.msra.mxu0 %v692
        %752 = vmatmul.bf16.gmra.mxu0 %v742
        %v753 = vpop.f32.mrf.mxu0
        %v754 = vadd.f32 0.0, %v753
        %v755 = vpop.f32.mrf.mxu0
        %756 = vdwg.mxu0
        %v757 = vmax.f32 %v709, %v731
        %v758 = vmax.f32 %v757, %v754
        %v759 = vsub.f32 %v709, %v758
        %v760 = vmul.f32 %v759, 1.442695
        %v761 = vpow.pop %v760
        %v762 = vsub.f32 %v731, %v758
        %v763 = vmul.f32 %v762, 1.442695
        %v764 = vpow.pop %v763
        %v765 = vsub.f32 %v754, %v758
        %v766 = vmul.f32 %v765, 1.442695
        %v767 = vpow.pop %v766
        %v768 = vadd.f32 %v761, %v764
        %v769 = vadd.f32 %v768, %v767
        %770 = vrot.lane.b32.xlu0 %v641, 64
        %v771 = vpop.permute.xlu0 %770
        %v773 = vmul.f32 %v761, %v771
        %774 = vrot.lane.b32.xlu0 %v658, 64
        %v775 = vpop.permute.xlu0 %774
        %v777 = vmul.f32 %v764, %v775
        %v778 = vadd.f32 %v773, %v777
        %779 = vrot.lane.b32.xlu0 %v734, 64
        %v780 = vpop.permute.xlu0 %779
        %v782 = vmul.f32 %v767, %v780
        %v783 = vadd.f32 %v778, %v782
        %v784 = vrcp.pop %v769
        %v785 = vmul.f32 %v783, %v784
        %v786 = vpack.c.bf16 %v785, %v785
        %v788 = vperm.slane %v612, 0
        %v794 = vunpack.c.l.b16 %v604
        %v795 = vunpack.c.l.b16 %v605
        %v796 = vunpack.c.l.b16 %v606
        %v797 = vunpack.c.l.b16 %v607
        %v798 = vpack.c.b16 %v795, %v794
        %v799 = vpack.c.b16 %v797, %v796
        %v803 = vsel %vm627, %v786, 0
        %805 = vmatpush.bf16.msra.mxu0 0
        %806 = vmatpush.bf16.msra.mxu0 0
        %807 = vmatpush.bf16.msra.mxu0 0
        %808 = vmatpush.bf16.msra.mxu0 0
        %809 = vmatpush.bf16.msra.mxu0 0
        %810 = vmatpush.bf16.msra.mxu0 0
        %811 = vmatpush.bf16.msra.mxu0 %v799
        %812 = vmatpush.bf16.msra.mxu0 %v798
        %813 = vmatmul.bf16.gmra.mxu0 %v803
        %v814 = vpop.f32.mrf.mxu0
        %v815 = vadd.f32 %v788, %v814
        %v816 = vpop.f32.mrf.mxu0
        %817 = vdwg.mxu0
        %v818 = vmul.f32 %v658, %v680
        %v819 = vpack.c.bf16 %v818, %v818
        %v821 = vsel %vm627, %v819, 0
        %823 = vmatpush.bf16.msra.mxu0 0
        %824 = vmatpush.bf16.msra.mxu0 0
        %825 = vmatpush.bf16.msra.mxu0 0
        %826 = vmatpush.bf16.msra.mxu0 0
        %827 = vmatpush.bf16.msra.mxu0 0
        %828 = vmatpush.bf16.msra.mxu0 0
        %829 = vmatpush.bf16.msra.mxu0 %v693
        %830 = vmatpush.bf16.msra.mxu0 %v692
        %831 = vmatmul.bf16.gmra.mxu0 %v821
        %v832 = vpop.f32.mrf.mxu0
        %v833 = vadd.f32 0.0, %v832
        %v834 = vpop.f32.mrf.mxu0
        %835 = vdwg.mxu0
        %v836 = vmul.f32 %v658, %v714
        %v837 = vpack.c.bf16 %v836, %v836
        %v839 = vsel %vm627, %v837, 0
        %841 = vmatpush.bf16.msra.mxu0 0
        %842 = vmatpush.bf16.msra.mxu0 0
        %843 = vmatpush.bf16.msra.mxu0 0
        %844 = vmatpush.bf16.msra.mxu0 0
        %845 = vmatpush.bf16.msra.mxu0 0
        %846 = vmatpush.bf16.msra.mxu0 0
        %847 = vmatpush.bf16.msra.mxu0 %v693
        %848 = vmatpush.bf16.msra.mxu0 %v692
        %849 = vmatmul.bf16.gmra.mxu0 %v839
        %v850 = vpop.f32.mrf.mxu0
        %v851 = vadd.f32 0.0, %v850
        %v852 = vpop.f32.mrf.mxu0
        %853 = vdwg.mxu0
        %v854 = vperm.slane %v675, 1
        %856 = vrot.lane.b32.xlu0 %v854, 96
        %v857 = vpop.permute.xlu0 %856
        %v859 = vmul.f32 %v658, %v857
        %v860 = vpack.c.bf16 %v859, %v859
        %v862 = vsel %vm627, %v860, 0
        %864 = vmatpush.bf16.msra.mxu0 0
        %865 = vmatpush.bf16.msra.mxu0 0
        %866 = vmatpush.bf16.msra.mxu0 0
        %867 = vmatpush.bf16.msra.mxu0 0
        %868 = vmatpush.bf16.msra.mxu0 0
        %869 = vmatpush.bf16.msra.mxu0 0
        %870 = vmatpush.bf16.msra.mxu0 %v693
        %871 = vmatpush.bf16.msra.mxu0 %v692
        %872 = vmatmul.bf16.gmra.mxu0 %v862
        %v873 = vpop.f32.mrf.mxu0
        %v874 = vadd.f32 0.0, %v873
        %v875 = vpop.f32.mrf.mxu0
        %876 = vdwg.mxu0
        %v877 = vmax.f32 %v833, %v851
        %v878 = vmax.f32 %v877, %v874
        %v879 = vsub.f32 %v833, %v878
        %v880 = vmul.f32 %v879, 1.442695
        %v881 = vpow.pop %v880
        %v882 = vsub.f32 %v851, %v878
        %v883 = vmul.f32 %v882, 1.442695
        %v884 = vpow.pop %v883
        %v885 = vsub.f32 %v874, %v878
        %v886 = vmul.f32 %v885, 1.442695
        %v887 = vpow.pop %v886
        %v888 = vadd.f32 %v881, %v884
        %v889 = vadd.f32 %v888, %v887
        %v890 = vmul.f32 %v881, %v771
        %v891 = vmul.f32 %v884, %v775
        %v892 = vadd.f32 %v890, %v891
        %893 = vrot.lane.b32.xlu0 %v854, 64
        %v894 = vpop.permute.xlu0 %893
        %v896 = vmul.f32 %v887, %v894
        %v897 = vadd.f32 %v892, %v896
        %v898 = vrcp.pop %v889
        %v899 = vmul.f32 %v897, %v898
        %v900 = vpack.c.bf16 %v899, %v899
        %v902 = vsel %vm627, %v900, 0
        %904 = vmatpush.bf16.msra.mxu0 0
        %905 = vmatpush.bf16.msra.mxu0 0
        %906 = vmatpush.bf16.msra.mxu0 0
        %907 = vmatpush.bf16.msra.mxu0 0
        %908 = vmatpush.bf16.msra.mxu0 0
        %909 = vmatpush.bf16.msra.mxu0 0
        %910 = vmatpush.bf16.msra.mxu0 %v799
        %911 = vmatpush.bf16.msra.mxu0 %v798
        %912 = vmatmul.bf16.gmra.mxu0 %v902
        %v913 = vpop.f32.mrf.mxu0
        %v914 = vadd.f32 %v788, %v913
        %v915 = vpop.f32.mrf.mxu0
        %916 = vdwg.mxu0
        %v917 = vmul.f32 %v734, %v680
        %v918 = vpack.c.bf16 %v917, %v917
        %v920 = vsel %vm627, %v918, 0
        %922 = vmatpush.bf16.msra.mxu0 0
        %923 = vmatpush.bf16.msra.mxu0 0
        %924 = vmatpush.bf16.msra.mxu0 0
        %925 = vmatpush.bf16.msra.mxu0 0
        %926 = vmatpush.bf16.msra.mxu0 0
        %927 = vmatpush.bf16.msra.mxu0 0
        %928 = vmatpush.bf16.msra.mxu0 %v693
        %929 = vmatpush.bf16.msra.mxu0 %v692
        %930 = vmatmul.bf16.gmra.mxu0 %v920
        %v931 = vpop.f32.mrf.mxu0
        %v932 = vadd.f32 0.0, %v931
        %v933 = vpop.f32.mrf.mxu0
        %934 = vdwg.mxu0
        %936 = vrot.lane.b32.xlu0 %v675, 96
        %v937 = vpop.permute.xlu0 %936
        %v939 = vmul.f32 %v675, %v937
        %v940 = vpack.c.bf16 %v939, %v939
        %v942 = vsel %vm627, %v940, 0
        %944 = vmatpush.bf16.msra.mxu0 0
        %945 = vmatpush.bf16.msra.mxu0 0
        %946 = vmatpush.bf16.msra.mxu0 0
        %947 = vmatpush.bf16.msra.mxu0 0
        %948 = vmatpush.bf16.msra.mxu0 0
        %949 = vmatpush.bf16.msra.mxu0 0
        %950 = vmatpush.bf16.msra.mxu0 %v693
        %951 = vmatpush.bf16.msra.mxu0 %v692
        %952 = vmatmul.bf16.gmra.mxu0 %v942
        %v953 = vpop.f32.mrf.mxu0
        %v954 = vadd.f32 0.0, %v953
        %v955 = vpop.f32.mrf.mxu0
        %956 = vdwg.mxu0
        %v957 = vrot.slane %v675, 1
        %958 = vrot.lane.b32.xlu0 %v957, 96
        %v959 = vpop.permute.xlu0 %958
        %v961 = vmul.f32 %v675, %v959
        %v962 = vpack.c.bf16 %v961, %v961
        %v964 = vsel %vm627, %v962, 0
        %966 = vmatpush.bf16.msra.mxu0 0
        %967 = vmatpush.bf16.msra.mxu0 0
        %968 = vmatpush.bf16.msra.mxu0 0
        %969 = vmatpush.bf16.msra.mxu0 0
        %970 = vmatpush.bf16.msra.mxu0 0
        %971 = vmatpush.bf16.msra.mxu0 0
        %972 = vmatpush.bf16.msra.mxu0 %v693
        %973 = vmatpush.bf16.msra.mxu0 %v692
        %974 = vmatmul.bf16.gmra.mxu0 %v964
        %v975 = vpop.f32.mrf.mxu0
        %v976 = vadd.f32 0.0, %v975
        %v977 = vpop.f32.mrf.mxu0
        %978 = vdwg.mxu0
        %v979 = vperm.slane %v954, 0
        %v980 = vmax.f32 %v932, %v979
        %v981 = vperm.slane %v976, 0
        %v982 = vmax.f32 %v980, %v981
        %v983 = vsub.f32 %v932, %v982
        %v984 = vmul.f32 %v983, 1.442695
        %v985 = vpow.pop %v984
        %v986 = vsub.f32 %v979, %v982
        %v987 = vmul.f32 %v986, 1.442695
        %v988 = vpow.pop %v987
        %v989 = vsub.f32 %v981, %v982
        %v990 = vmul.f32 %v989, 1.442695
        %v991 = vpow.pop %v990
        %v992 = vadd.f32 %v985, %v988
        %v993 = vadd.f32 %v992, %v991
        %v994 = vmul.f32 %v985, %v771
        %v995 = vmul.f32 %v988, %v780
        %v996 = vadd.f32 %v994, %v995
        %v997 = vmul.f32 %v991, %v894
        %v998 = vadd.f32 %v996, %v997
        %v999 = vrcp.pop %v993
        %v1000 = vmul.f32 %v998, %v999
        %v1001 = vpack.c.bf16 %v1000, %v1000
        %v1003 = vsel %vm627, %v1001, 0
        %1005 = vmatpush.bf16.msra.mxu0 0
        %1006 = vmatpush.bf16.msra.mxu0 0
        %1007 = vmatpush.bf16.msra.mxu0 0
        %1008 = vmatpush.bf16.msra.mxu0 0
        %1009 = vmatpush.bf16.msra.mxu0 0
        %1010 = vmatpush.bf16.msra.mxu0 0
        %1011 = vmatpush.bf16.msra.mxu0 %v799
        %1012 = vmatpush.bf16.msra.mxu0 %v798
        %1013 = vmatmul.bf16.gmra.mxu0 %v1003
        %v1014 = vpop.f32.mrf.mxu0
        %v1015 = vadd.f32 %v788, %v1014
        %v1016 = vpop.f32.mrf.mxu0
        %1017 = vdwg.mxu0
        %v1018 = vmul.f32 %v854, %v714
        %v1019 = vpack.c.bf16 %v1018, %v1018
        %v1021 = vsel %vm627, %v1019, 0
        %1023 = vmatpush.bf16.msra.mxu0 0
        %1024 = vmatpush.bf16.msra.mxu0 0
        %1025 = vmatpush.bf16.msra.mxu0 0
        %1026 = vmatpush.bf16.msra.mxu0 0
        %1027 = vmatpush.bf16.msra.mxu0 0
        %1028 = vmatpush.bf16.msra.mxu0 0
        %1029 = vmatpush.bf16.msra.mxu0 %v693
        %1030 = vmatpush.bf16.msra.mxu0 %v692
        %1031 = vmatmul.bf16.gmra.mxu0 %v1021
        %v1032 = vpop.f32.mrf.mxu0
        %v1033 = vadd.f32 0.0, %v1032
        %v1034 = vpop.f32.mrf.mxu0
        %1035 = vdwg.mxu0
        %v1036 = vrot.slane %v675, 7
        %1037 = vrot.lane.b32.xlu0 %v1036, 96
        %v1038 = vpop.permute.xlu0 %1037
        %v1040 = vmul.f32 %v675, %v1038
        %v1041 = vpack.c.bf16 %v1040, %v1040
        %v1043 = vshrl.u32 %v1041, 16
        %v1046 = vsel %vm627, %v1043, 0
        %1048 = vmatpush.bf16.msra.mxu0 0
        %1049 = vmatpush.bf16.msra.mxu0 0
        %1050 = vmatpush.bf16.msra.mxu0 0
        %1051 = vmatpush.bf16.msra.mxu0 0
        %1052 = vmatpush.bf16.msra.mxu0 0
        %1053 = vmatpush.bf16.msra.mxu0 0
        %1054 = vmatpush.bf16.msra.mxu0 %v693
        %1055 = vmatpush.bf16.msra.mxu0 %v692
        %1056 = vmatmul.bf16.gmra.mxu0 %v1046
        %v1057 = vpop.f32.mrf.mxu0
        %v1058 = vadd.f32 0.0, %v1057
        %v1059 = vpop.f32.mrf.mxu0
        %1060 = vdwg.mxu0
        %v1061 = vshrl.u32 %v940, 16
        %v1064 = vsel %vm627, %v1061, 0
        %1066 = vmatpush.bf16.msra.mxu0 0
        %1067 = vmatpush.bf16.msra.mxu0 0
        %1068 = vmatpush.bf16.msra.mxu0 0
        %1069 = vmatpush.bf16.msra.mxu0 0
        %1070 = vmatpush.bf16.msra.mxu0 0
        %1071 = vmatpush.bf16.msra.mxu0 0
        %1072 = vmatpush.bf16.msra.mxu0 %v693
        %1073 = vmatpush.bf16.msra.mxu0 %v692
        %1074 = vmatmul.bf16.gmra.mxu0 %v1064
        %v1075 = vpop.f32.mrf.mxu0
        %v1076 = vadd.f32 0.0, %v1075
        %v1077 = vpop.f32.mrf.mxu0
        %1078 = vdwg.mxu0
        %v1079 = vperm.slane %v1058, 0
        %v1080 = vmax.f32 %v1033, %v1079
        %v1081 = vperm.slane %v1076, 0
        %v1082 = vmax.f32 %v1080, %v1081
        %v1083 = vsub.f32 %v1033, %v1082
        %v1084 = vmul.f32 %v1083, 1.442695
        %v1085 = vpow.pop %v1084
        %v1086 = vsub.f32 %v1079, %v1082
        %v1087 = vmul.f32 %v1086, 1.442695
        %v1088 = vpow.pop %v1087
        %v1089 = vsub.f32 %v1081, %v1082
        %v1090 = vmul.f32 %v1089, 1.442695
        %v1091 = vpow.pop %v1090
        %v1092 = vadd.f32 %v1085, %v1088
        %v1093 = vadd.f32 %v1092, %v1091
        %v1094 = vmul.f32 %v1085, %v775
        %v1095 = vmul.f32 %v1088, %v780
        %v1096 = vadd.f32 %v1094, %v1095
        %v1097 = vmul.f32 %v1091, %v894
        %v1098 = vadd.f32 %v1096, %v1097
        %v1099 = vrcp.pop %v1093
        %v1100 = vmul.f32 %v1098, %v1099
        %v1101 = vpack.c.bf16 %v1100, %v1100
        %v1103 = vsel %vm627, %v1101, 0
        %1105 = vmatpush.bf16.msra.mxu0 0
        %1106 = vmatpush.bf16.msra.mxu0 0
        %1107 = vmatpush.bf16.msra.mxu0 0
        %1108 = vmatpush.bf16.msra.mxu0 0
        %1109 = vmatpush.bf16.msra.mxu0 0
        %1110 = vmatpush.bf16.msra.mxu0 0
        %1111 = vmatpush.bf16.msra.mxu0 %v799
        %1112 = vmatpush.bf16.msra.mxu0 %v798
        %1113 = vmatmul.bf16.gmra.mxu0 %v1103
        %v1114 = vpop.f32.mrf.mxu0
        %v1115 = vadd.f32 %v788, %v1114
        %v1116 = vpop.f32.mrf.mxu0
        %1117 = vdwg.mxu0
        %v1118 = vpack.c.bf16 %v815, %v815
        %v1123 = vunpack.c.l.b16 %v600
        %v1124 = vunpack.c.l.b16 %v601
        %v1125 = vunpack.c.l.b16 %v602
        %v1126 = vunpack.c.l.b16 %v603
        %v1127 = vpack.c.b16 %v1124, %v1123
        %v1128 = vpack.c.b16 %v1126, %v1125
        %v1132 = vsel %vm627, %v1118, 0
        %1134 = vmatpush.bf16.msra.mxu0 0
        %1135 = vmatpush.bf16.msra.mxu0 0
        %1136 = vmatpush.bf16.msra.mxu0 0
        %1137 = vmatpush.bf16.msra.mxu0 0
        %1138 = vmatpush.bf16.msra.mxu0 0
        %1139 = vmatpush.bf16.msra.mxu0 0
        %1140 = vmatpush.bf16.msra.mxu0 %v1128
        %1141 = vmatpush.bf16.msra.mxu0 %v1127
        %1142 = vmatmul.bf16.gmra.mxu0 %v1132
        %v1143 = vpop.f32.mrf.mxu0
        %v1144 = vadd.f32 0.0, %v1143
        %v1145 = vpop.f32.mrf.mxu0
        %1146 = vdwg.mxu0
        %v1147 = vpack.c.bf16 %v914, %v914
        %v1149 = vsel %vm627, %v1147, 0
        %1151 = vmatpush.bf16.msra.mxu0 0
        %1152 = vmatpush.bf16.msra.mxu0 0
        %1153 = vmatpush.bf16.msra.mxu0 0
        %1154 = vmatpush.bf16.msra.mxu0 0
        %1155 = vmatpush.bf16.msra.mxu0 0
        %1156 = vmatpush.bf16.msra.mxu0 0
        %1157 = vmatpush.bf16.msra.mxu0 %v1128
        %1158 = vmatpush.bf16.msra.mxu0 %v1127
        %1159 = vmatmul.bf16.gmra.mxu0 %v1149
        %v1160 = vpop.f32.mrf.mxu0
        %v1161 = vadd.f32 0.0, %v1160
        %v1162 = vpop.f32.mrf.mxu0
        %1163 = vdwg.mxu0
        %v1164 = vpack.c.bf16 %v1015, %v1015
        %v1166 = vsel %vm627, %v1164, 0
        %1168 = vmatpush.bf16.msra.mxu0 0
        %1169 = vmatpush.bf16.msra.mxu0 0
        %1170 = vmatpush.bf16.msra.mxu0 0
        %1171 = vmatpush.bf16.msra.mxu0 0
        %1172 = vmatpush.bf16.msra.mxu0 0
        %1173 = vmatpush.bf16.msra.mxu0 0
        %1174 = vmatpush.bf16.msra.mxu0 %v1128
        %1175 = vmatpush.bf16.msra.mxu0 %v1127
        %1176 = vmatmul.bf16.gmra.mxu0 %v1166
        %v1177 = vpop.f32.mrf.mxu0
        %v1178 = vadd.f32 0.0, %v1177
        %v1179 = vpop.f32.mrf.mxu0
        %1180 = vdwg.mxu0
        %v1181 = vpack.c.bf16 %v1115, %v1115
        %v1183 = vsel %vm627, %v1181, 0
        %1185 = vmatpush.bf16.msra.mxu0 0
        %1186 = vmatpush.bf16.msra.mxu0 0
        %1187 = vmatpush.bf16.msra.mxu0 0
        %1188 = vmatpush.bf16.msra.mxu0 0
        %1189 = vmatpush.bf16.msra.mxu0 0
        %1190 = vmatpush.bf16.msra.mxu0 0
        %1191 = vmatpush.bf16.msra.mxu0 %v1128
        %1192 = vmatpush.bf16.msra.mxu0 %v1127
        %1193 = vmatmul.bf16.gmra.mxu0 %v1183
        %v1194 = vpop.f32.mrf.mxu0
        %v1195 = vadd.f32 0.0, %v1194
        %v1196 = vpop.f32.mrf.mxu0
        %1197 = vdwg.mxu0
        %1199 = vrot.lane.b32.xlu0 %v1144, 96
        %v1200 = vpop.permute.xlu0 %1199
        %v1202 = vmul.f32 %v1144, %v1200
        %v1203 = vpack.c.bf16 %v1202, %v1202
        %v1205 = vsel %vm627, %v1203, 0
        %1207 = vmatpush.bf16.msra.mxu0 0
        %1208 = vmatpush.bf16.msra.mxu0 0
        %1209 = vmatpush.bf16.msra.mxu0 0
        %1210 = vmatpush.bf16.msra.mxu0 0
        %1211 = vmatpush.bf16.msra.mxu0 0
        %1212 = vmatpush.bf16.msra.mxu0 0
        %1213 = vmatpush.bf16.msra.mxu0 %v693
        %1214 = vmatpush.bf16.msra.mxu0 %v692
        %1215 = vmatmul.bf16.gmra.mxu0 %v1205
        %v1216 = vpop.f32.mrf.mxu0
        %v1217 = vadd.f32 0.0, %v1216
        %v1218 = vpop.f32.mrf.mxu0
        %1219 = vdwg.mxu0
        %1221 = vrot.lane.b32.xlu0 %v1178, 96
        %v1222 = vpop.permute.xlu0 %1221
        %v1224 = vmul.f32 %v1144, %v1222
        %v1225 = vpack.c.bf16 %v1224, %v1224
        %v1227 = vsel %vm627, %v1225, 0
        %1229 = vmatpush.bf16.msra.mxu0 0
        %1230 = vmatpush.bf16.msra.mxu0 0
        %1231 = vmatpush.bf16.msra.mxu0 0
        %1232 = vmatpush.bf16.msra.mxu0 0
        %1233 = vmatpush.bf16.msra.mxu0 0
        %1234 = vmatpush.bf16.msra.mxu0 0
        %1235 = vmatpush.bf16.msra.mxu0 %v693
        %1236 = vmatpush.bf16.msra.mxu0 %v692
        %1237 = vmatmul.bf16.gmra.mxu0 %v1227
        %v1238 = vpop.f32.mrf.mxu0
        %v1239 = vadd.f32 0.0, %v1238
        %v1240 = vpop.f32.mrf.mxu0
        %1241 = vdwg.mxu0
        %v1242 = vmax.f32 %v1217, %v1239
        %v1243 = vsub.f32 %v1217, %v1242
        %v1244 = vmul.f32 %v1243, 1.442695
        %v1245 = vpow.pop %v1244
        %v1246 = vsub.f32 %v1239, %v1242
        %v1247 = vmul.f32 %v1246, 1.442695
        %v1248 = vpow.pop %v1247
        %v1249 = vadd.f32 %v1245, %v1248
        %1250 = vrot.lane.b32.xlu0 %v1144, 64
        %v1251 = vpop.permute.xlu0 %1250
        %v1253 = vmul.f32 %v1245, %v1251
        %1254 = vrot.lane.b32.xlu0 %v1178, 64
        %v1255 = vpop.permute.xlu0 %1254
        %v1257 = vmul.f32 %v1248, %v1255
        %v1258 = vadd.f32 %v1253, %v1257
        %v1259 = vrcp.pop %v1249
        %v1260 = vmul.f32 %v1258, %v1259
        %v1261 = vpack.c.bf16 %v1260, %v1260
        %v1263 = vperm.slane %v613, 0
        %v1269 = vunpack.c.l.b16 %v608
        %v1270 = vunpack.c.l.b16 %v609
        %v1271 = vunpack.c.l.b16 %v610
        %v1272 = vunpack.c.l.b16 %v611
        %v1273 = vpack.c.b16 %v1270, %v1269
        %v1274 = vpack.c.b16 %v1272, %v1271
        %v1278 = vsel %vm627, %v1261, 0
        %1280 = vmatpush.bf16.msra.mxu0 0
        %1281 = vmatpush.bf16.msra.mxu0 0
        %1282 = vmatpush.bf16.msra.mxu0 0
        %1283 = vmatpush.bf16.msra.mxu0 0
        %1284 = vmatpush.bf16.msra.mxu0 0
        %1285 = vmatpush.bf16.msra.mxu0 0
        %1286 = vmatpush.bf16.msra.mxu0 %v1274
        %1287 = vmatpush.bf16.msra.mxu0 %v1273
        %1288 = vmatmul.bf16.gmra.mxu0 %v1278
        %v1289 = vpop.f32.mrf.mxu0
        %v1290 = vadd.f32 %v1263, %v1289
        %v1291 = vpop.f32.mrf.mxu0
        %1292 = vdwg.mxu0
        %1294 = vrot.lane.b32.xlu0 %v1161, 96
        %v1295 = vpop.permute.xlu0 %1294
        %v1297 = vmul.f32 %v1161, %v1295
        %v1298 = vpack.c.bf16 %v1297, %v1297
        %v1300 = vsel %vm627, %v1298, 0
        %1302 = vmatpush.bf16.msra.mxu0 0
        %1303 = vmatpush.bf16.msra.mxu0 0
        %1304 = vmatpush.bf16.msra.mxu0 0
        %1305 = vmatpush.bf16.msra.mxu0 0
        %1306 = vmatpush.bf16.msra.mxu0 0
        %1307 = vmatpush.bf16.msra.mxu0 0
        %1308 = vmatpush.bf16.msra.mxu0 %v693
        %1309 = vmatpush.bf16.msra.mxu0 %v692
        %1310 = vmatmul.bf16.gmra.mxu0 %v1300
        %v1311 = vpop.f32.mrf.mxu0
        %v1312 = vadd.f32 0.0, %v1311
        %v1313 = vpop.f32.mrf.mxu0
        %1314 = vdwg.mxu0
        %1316 = vrot.lane.b32.xlu0 %v1195, 96
        %v1317 = vpop.permute.xlu0 %1316
        %v1319 = vmul.f32 %v1161, %v1317
        %v1320 = vpack.c.bf16 %v1319, %v1319
        %v1322 = vsel %vm627, %v1320, 0
        %1324 = vmatpush.bf16.msra.mxu0 0
        %1325 = vmatpush.bf16.msra.mxu0 0
        %1326 = vmatpush.bf16.msra.mxu0 0
        %1327 = vmatpush.bf16.msra.mxu0 0
        %1328 = vmatpush.bf16.msra.mxu0 0
        %1329 = vmatpush.bf16.msra.mxu0 0
        %1330 = vmatpush.bf16.msra.mxu0 %v693
        %1331 = vmatpush.bf16.msra.mxu0 %v692
        %1332 = vmatmul.bf16.gmra.mxu0 %v1322
        %v1333 = vpop.f32.mrf.mxu0
        %v1334 = vadd.f32 0.0, %v1333
        %v1335 = vpop.f32.mrf.mxu0
        %1336 = vdwg.mxu0
        %v1337 = vmax.f32 %v1312, %v1334
        %v1338 = vsub.f32 %v1312, %v1337
        %v1339 = vmul.f32 %v1338, 1.442695
        %v1340 = vpow.pop %v1339
        %v1341 = vsub.f32 %v1334, %v1337
        %v1342 = vmul.f32 %v1341, 1.442695
        %v1343 = vpow.pop %v1342
        %v1344 = vadd.f32 %v1340, %v1343
        %1345 = vrot.lane.b32.xlu0 %v1161, 64
        %v1346 = vpop.permute.xlu0 %1345
        %v1348 = vmul.f32 %v1340, %v1346
        %1349 = vrot.lane.b32.xlu0 %v1195, 64
        %v1350 = vpop.permute.xlu0 %1349
        %v1352 = vmul.f32 %v1343, %v1350
        %v1353 = vadd.f32 %v1348, %v1352
        %v1354 = vrcp.pop %v1344
        %v1355 = vmul.f32 %v1353, %v1354
        %v1356 = vpack.c.bf16 %v1355, %v1355
        %v1358 = vsel %vm627, %v1356, 0
        %1360 = vmatpush.bf16.msra.mxu0 0
        %1361 = vmatpush.bf16.msra.mxu0 0
        %1362 = vmatpush.bf16.msra.mxu0 0
        %1363 = vmatpush.bf16.msra.mxu0 0
        %1364 = vmatpush.bf16.msra.mxu0 0
        %1365 = vmatpush.bf16.msra.mxu0 0
        %1366 = vmatpush.bf16.msra.mxu0 %v1274
        %1367 = vmatpush.bf16.msra.mxu0 %v1273
        %1368 = vmatmul.bf16.gmra.mxu0 %v1358
        %v1369 = vpop.f32.mrf.mxu0
        %v1370 = vadd.f32 %v1263, %v1369
        %v1371 = vpop.f32.mrf.mxu0
        %1372 = vdwg.mxu0
        %1373 = vst.msk [vmem:[%s583] sm:$0xff] %vm627, %v1290
        %1374 = vst.msk [vmem:[%s590] sm:$0xff] %vm627, %v1370
        %s1375 = sand.u32 %s289, 1
        %s1376 = scalar_lea.sflag [#allocation4], %s1375
        %s1377 = sand.u32 %s289, 1
        %s1378 = smul.addr %s1377, 8
        %s1379 = scalar_lea.vmem [#allocation16], %s1378
        %s1380 = sand.u32 %s317, 1
        %s1381 = scalar_lea.sflag [#allocation18], %s1380
        %s1382 = sand.u32 %s317, 1
        %s1383 = smul.addr %s1382, 8
        %s1384 = scalar_lea.vmem [#allocation17], %s1383
        // Predicated region
        $region93: #{tpu_custom_call.1} parent=59 // pred_check
          %p1385 = pneg %p299
        $region94: #{tpu_custom_call.1} parent=59 // pred_check_branch
          %1387 = sbr.rel (%p1385) target = $region96
        $region95: #{tpu_custom_call.1} parent=59 // pred_region
          %1389 = vsyncadd %s1376, 0
          %s1390 = sadd.s32 %s43, %s42
          %s1391 = smul.addr %s1390, 8
          %s1392 = scalar_lea.hbm %s10, %s1391
          %s1394 = sshll.u32 %s1379, 4
          %s1395 = int_to_ptr.vmem [resolvable:$true] %s1394
          %s1396 = sshll.u32 %s1392, 4
          %s1397 = int_to_ptr.hbm [resolvable:$true] %s1396
          %1399 = dma.vmem_to_hbm [thread:$0]  %s1395, 128, %s1397, %s1376
        $region96: #{tpu_custom_call.1} parent=59 // pred_fallthru
          _
        // Predicated region
        $region97: #{tpu_custom_call.1} parent=59 // pred_check
          %p1400 = pneg %p327
        $region98: #{tpu_custom_call.1} parent=59 // pred_check_branch
          %1402 = sbr.rel (%p1400) target = $region100
        $region99: #{tpu_custom_call.1} parent=59 // pred_region
          %1404 = vsyncadd %s1381, 0
          %s1405 = sadd.s32 %s43, %s42
          %s1406 = smul.addr %s1405, 8
          %s1407 = scalar_lea.hbm %s11, %s1406
          %s1409 = sshll.u32 %s1384, 4
          %s1410 = int_to_ptr.vmem [resolvable:$true] %s1409
          %s1411 = sshll.u32 %s1407, 4
          %s1412 = int_to_ptr.hbm [resolvable:$true] %s1411
          %1414 = dma.vmem_to_hbm [thread:$0]  %s1410, 128, %s1412, %s1381
        $region100: #{tpu_custom_call.1} parent=59 // pred_fallthru
          _
      $region60: #{tpu_custom_call.1} parent=5 // pred_fallthru
        _
      %p1415 = scmp.le.s32.totalorder 2, %s33
      // Predicated region
      $region101: #{tpu_custom_call.1} parent=5 // pred_check
        %p1416 = pneg %p1415
      $region102: #{tpu_custom_call.1} parent=5 // pred_check_branch
        %1418 = sbr.rel (%p1416) target = $region104
      $region103: #{tpu_custom_call.1} parent=5 // pred_region
        %s1419 = ssub.s32 %s33, 2
        // Predicated region
        $region105: #{tpu_custom_call.1} parent=103 // pred_check
          %p1420 = pneg %p305
        $region106: #{tpu_custom_call.1} parent=103 // pred_check_branch
          %1422 = sbr.rel (%p1420) target = $region108
        $region107: #{tpu_custom_call.1} parent=103 // pred_region
          %s1423 = sand.u32 %s290, 1
          %s1424 = scalar_lea.sflag [#allocation4], %s1423
          %s1425 = sand.u32 %s290, 1
          %s1426 = smul.addr %s1425, 8
          %s1427 = scalar_lea.vmem [#allocation16], %s1426
          %1429 = dma.done %s1424, 128
        $region108: #{tpu_custom_call.1} parent=103 // pred_fallthru
          _
        // Predicated region
        $region109: #{tpu_custom_call.1} parent=103 // pred_check
          %p1430 = pneg %p333
        $region110: #{tpu_custom_call.1} parent=103 // pred_check_branch
          %1432 = sbr.rel (%p1430) target = $region112
        $region111: #{tpu_custom_call.1} parent=103 // pred_region
          %s1433 = sand.u32 %s318, 1
          %s1434 = scalar_lea.sflag [#allocation18], %s1433
          %s1435 = sand.u32 %s318, 1
          %s1436 = smul.addr %s1435, 8
          %s1437 = scalar_lea.vmem [#allocation17], %s1436
          %1439 = dma.done %s1434, 128
        $region112: #{tpu_custom_call.1} parent=103 // pred_fallthru
          _
      $region104: #{tpu_custom_call.1} parent=5 // pred_fallthru
        _
    $region6: #{tpu_custom_call.1} parent=1 // loop_footer
      %s37 = sadd.s32 1, %s33
    $region7: #{tpu_custom_call.1} parent=1 // loop_footer_branch
      %32 = sbr.rel target = $region3
    $region8: #{tpu_custom_call.1} parent=1 // loop_exit
      _
    %1440 = vsyncpa [#allocation3], 1
    %s1441 = scalar_lea.sflag [#allocation3], 1
    %1442 = vsyncpa %s1441, 1
    %1443 = vsyncpa [#allocation6], 1
    %s1444 = scalar_lea.sflag [#allocation6], 1
    %1445 = vsyncpa %s1444, 1
    %1446 = vsyncpa [#allocation9], 1
    %1447 = vsyncpa [#allocation12], 1
    %1448 = vsyncpa [#allocation15], 1
    %1449 = vsyncpa [#allocation4], 1
    %s1450 = scalar_lea.sflag [#allocation4], 1
    %1451 = vsyncpa %s1450, 1
    %1452 = vsyncpa [#allocation18], 1
    %s1453 = scalar_lea.sflag [#allocation18], 1
    %1454 = vsyncpa %s1453, 1

</llo_original>
